<compile_context>
chip_gen: v5e
topology: v5e:2x2
jax: 0.10.0
libtpu: 0.0.40
codegen_flags: <defaults>
</compile_context>

<pallas_src>
import jax
import jax.numpy as jnp
import numpy as np
from jax.experimental import pallas as pl
from jax.experimental.pallas import tpu as pltpu

IN_FEATS = 32      # interaction_features
N_CLASSES = 5      # len(event_classes)
N_EVT = 300        # events (interaction nodes) across the PyG batch
C_PAD = 128        # class (lane) dimension padded to full lane width
NEG_BIG = -1e30    # finite "-inf" for padded class columns (avoids 0*inf -> NaN)


def event_decoder_kernel(x_ref, y_ref, wt_ref, b_ref, temp_ref,
                         e_ref, loss_ref):
    x = x_ref[...]            # [NP, F]  f32   (padding rows are zeros)
    y = y_ref[...]            # [NP, 1]  i32   (-1 for padding rows)
    n_rows, cp = e_ref.shape

    # ---- nn.Linear: logits = x @ W.T + b (MXU contracts the feature axis) ----
    logits = jnp.dot(x, wt_ref[...], preferred_element_type=jnp.float32) + b_ref[...]

    # ---- softmax(dim=1) -> data['evt'].e (padded class columns exp to 0) ----
    m = jnp.max(logits, axis=1, keepdims=True)                       # [NP, 1]
    shifted = logits - m                                             # [NP, CP] (reused below)
    ex = jnp.exp(shifted)                                            # [NP, CP]
    denom = jnp.sum(ex, axis=1, keepdims=True)                       # [NP, 1]
    inv = pl.reciprocal(denom, approx=True)                          # EUP slot
    inv = inv * (2.0 - denom * inv)                                  # 1 Newton step -> f32 accuracy
    e_ref[...] = ex * inv                                            # lane-dense store

    # ---- RecallLoss (fused, single pass) ----
    cls_ids = jax.lax.broadcasted_iota(jnp.int32, (n_rows, cp), 1)   # [NP, CP]
    y_onehot = (cls_ids == y).astype(jnp.float32)                    # all-zero for padding rows
    has_label = (y >= 0).astype(jnp.float32)                         # [NP, 1]

    # first-index argmax over classes (exactly matches torch input.max(1) tie-break)
    pred = jnp.min(jnp.where(logits == m, cls_ids, cp), axis=1, keepdims=True)   # [NP, 1]
    incorrect = (pred != y).astype(jnp.float32)                                  # [NP, 1]

    # per-row CE without materializing log_prob: ce = log(denom) - shifted[y]
    sel = jnp.sum(y_onehot * shifted, axis=1, keepdims=True)         # [NP, 1]
    ce = has_label * jnp.log(denom) - sel                            # [NP, 1] (0 for padding rows)

    gt = jnp.sum(y_onehot, axis=0, keepdims=True)                    # [1, CP] ground-truth count
    fn = jnp.sum(y_onehot * incorrect, axis=0, keepdims=True)        # [1, CP] false-negative count
    ces = jnp.sum(y_onehot * ce, axis=0, keepdims=True)              # [1, CP] CE sum per class

    # dynamic class weights + torch's weighted-mean cross entropy
    class_w = jnp.where(fn > 0, fn, 1.0) / jnp.where(gt > 0, gt, 1.0)
    recall_loss = jnp.sum(class_w * ces) / jnp.sum(class_w * gt)

    temp = temp_ref[0, 0]
    loss_ref[0, 0] = 2.0 * jnp.exp(-temp) * recall_loss + temp


def event_decoder_forward(x, y, w, b, temp):
    """Returns (loss, event softmax scores) exactly like EventDecoder.forward."""
    n, f = x.shape
    c = w.shape[0]
    n_pad = ((n + 7) // 8) * 8   # sublane multiple; whole problem stays in one VMEM tile

    # Pad rows to a sublane multiple (label -1 => zero one-hot => zero contribution),
    # pre-transpose W to [F, C_PAD] and pad the class lane dimension to 128.
    x_p = jnp.zeros((n_pad, f), jnp.float32).at[:n].set(x.astype(jnp.float32))
    y_p = jnp.full((n_pad, 1), -1, jnp.int32).at[:n, 0].set(y.astype(jnp.int32))
    wt_p = jnp.zeros((f, C_PAD), jnp.float32).at[:, :c].set(w.T.astype(jnp.float32))
    b_p = jnp.full((1, C_PAD), NEG_BIG, jnp.float32).at[0, :c].set(b.astype(jnp.float32))
    temp_p = jnp.reshape(temp, (1, 1)).astype(jnp.float32)

    e_pad, loss = pl.pallas_call(
        event_decoder_kernel,
        in_specs=[
            pl.BlockSpec(memory_space=pltpu.MemorySpace.VMEM),     # x (whole array, resident)
            pl.BlockSpec(memory_space=pltpu.MemorySpace.VMEM),     # y
            pl.BlockSpec(memory_space=pltpu.MemorySpace.VMEM),     # W^T
            pl.BlockSpec(memory_space=pltpu.MemorySpace.VMEM),     # bias
            pl.BlockSpec(memory_space=pltpu.MemorySpace.SMEM),     # temp scalar
        ],
        out_specs=(
            pl.BlockSpec(memory_space=pltpu.MemorySpace.VMEM),     # e (lane-dense, padded)
            pl.BlockSpec(memory_space=pltpu.MemorySpace.SMEM),     # scalar loss
        ),
        out_shape=(
            jax.ShapeDtypeStruct((n_pad, C_PAD), jnp.float32),
            jax.ShapeDtypeStruct((1, 1), jnp.float32),
        ),
    )(x_p, y_p, wt_p, b_p, temp_p)

    return loss[0, 0], e_pad[:n, :c]


def event_decoder_ref(x, y, w, b, temp):
    """Pure-JAX reference implementing the same semantics (for verification)."""
    logits = jnp.dot(x, w.T, precision=jax.lax.Precision.HIGHEST) + b[None, :]
    e = jax.nn.softmax(logits, axis=1)
    log_prob = jax.nn.log_softmax(logits, axis=1)
    c = w.shape[0]
    y_onehot = jax.nn.one_hot(y, c, dtype=jnp.float32)
    pred = jnp.argmax(logits, axis=1)
    incorrect = (pred != y).astype(jnp.float32)[:, None]
    gt_count = y_onehot.sum(0)
    fn_count = (y_onehot * incorrect).sum(0)
    class_w = jnp.where(fn_count > 0, fn_count, 1.0) / jnp.where(gt_count > 0, gt_count, 1.0)
    ce = -(y_onehot * log_prob).sum(1)
    sample_w = class_w[y]
    recall_loss = (sample_w * ce).sum() / sample_w.sum()
    loss = 2.0 * jnp.exp(-temp) * recall_loss + temp
    return loss, e


if __name__ == "__main__":
    key = jax.random.PRNGKey(0)
    kx, ky, kw, kb = jax.random.split(key, 4)

    # data['evt'].x : interaction node embeddings, data['evt'].y : labels
    x = jax.random.normal(kx, (N_EVT, IN_FEATS), dtype=jnp.float32)
    y = jax.random.randint(ky, (N_EVT,), 0, N_CLASSES, dtype=jnp.int32)

    # nn.Linear(interaction_features, num_classes) parameters (deterministic init)
    bound = 1.0 / np.sqrt(IN_FEATS)
    w = jax.random.uniform(kw, (N_CLASSES, IN_FEATS), jnp.float32, -bound, bound)
    b = jax.random.uniform(kb, (N_CLASSES,), jnp.float32, -bound, bound)

    # self.temp = nn.Parameter(torch.tensor(0.0))
    temp = jnp.float32(0.0)

    loss, e = event_decoder_forward(x, y, w, b, temp)
    jax.block_until_ready((loss, e))

    loss_ref, e_ref = event_decoder_ref(x, y, w, b, temp)
    np.testing.assert_allclose(np.asarray(loss), np.asarray(loss_ref), rtol=1e-4, atol=1e-5)
    np.testing.assert_allclose(np.asarray(e), np.asarray(e_ref), rtol=1e-4, atol=1e-5)

    print("KERNEL_OK")
</pallas_src>

<mosaic_0001>
module attributes {stable_mosaic.version = 11 : i64} {
  func.func @event_decoder_kernel(%arg0: memref<304x32xf32, #tpu.memory_space<vmem>>, %arg1: memref<304x1xi32, #tpu.memory_space<vmem>>, %arg2: memref<32x128xf32, #tpu.memory_space<vmem>>, %arg3: memref<1x128xf32, #tpu.memory_space<vmem>>, %arg4: memref<1x1xf32, #tpu.memory_space<smem>>, %arg5: memref<304x128xf32, #tpu.memory_space<vmem>>, %arg6: memref<1x1xf32, #tpu.memory_space<smem>>) attributes {dimension_semantics = [], scalar_prefetch = 0 : i64, scratch_operands = 0 : i64, tpu.core_type = #tpu.core_type<tc>} {
    %c0 = arith.constant 0 : index
    %c0_0 = arith.constant 0 : index
    %0 = vector.load %arg0[%c0, %c0_0] : memref<304x32xf32, #tpu.memory_space<vmem>>, vector<304x32xf32>
    %c0_1 = arith.constant 0 : index
    %c0_2 = arith.constant 0 : index
    %1 = vector.load %arg1[%c0_1, %c0_2] : memref<304x1xi32, #tpu.memory_space<vmem>>, vector<304x1xi32>
    %c0_3 = arith.constant 0 : index
    %c0_4 = arith.constant 0 : index
    %2 = vector.load %arg2[%c0_3, %c0_4] : memref<32x128xf32, #tpu.memory_space<vmem>>, vector<32x128xf32>
    %cst = arith.constant dense<0.000000e+00> : vector<304x128xf32>
    %3 = tpu.matmul %0, %2, %cst {dimension_numbers = #tpu.dot_dimension_numbers<[1], [0], [0], [1], [0, 0, 1, 1], [], []>} : vector<304x32xf32>, vector<32x128xf32>, vector<304x128xf32> -> vector<304x128xf32>
    %c0_5 = arith.constant 0 : index
    %c0_6 = arith.constant 0 : index
    %4 = vector.load %arg3[%c0_5, %c0_6] : memref<1x128xf32, #tpu.memory_space<vmem>>, vector<1x128xf32>
    %5 = vector.broadcast %4 : vector<1x128xf32> to vector<304x128xf32>
    %6 = arith.addf %3, %5 : vector<304x128xf32>
    %cst_7 = arith.constant dense<0xFF800000> : vector<304xf32>
    %7 = vector.multi_reduction <maximumf>, %6, %cst_7 [1] : vector<304x128xf32> to vector<304xf32>
    %8 = vector.shape_cast %7 : vector<304xf32> to vector<304x1xf32>
    %9 = vector.broadcast %8 : vector<304x1xf32> to vector<304x128xf32>
    %10 = arith.subf %6, %9 : vector<304x128xf32>
    %11 = math.exp %10 : vector<304x128xf32>
    %cst_8 = arith.constant dense<0.000000e+00> : vector<304xf32>
    %12 = vector.multi_reduction <add>, %11, %cst_8 [1] : vector<304x128xf32> to vector<304xf32>
    %13 = vector.shape_cast %12 : vector<304xf32> to vector<304x1xf32>
    %14 = tpu.reciprocal %13 {approx = true} : vector<304x1xf32> -> vector<304x1xf32>
    %15 = arith.mulf %13, %14 : vector<304x1xf32>
    %cst_9 = arith.constant 2.000000e+00 : f32
    %16 = vector.broadcast %cst_9 : f32 to vector<304x1xf32>
    %17 = arith.subf %16, %15 : vector<304x1xf32>
    %18 = arith.mulf %14, %17 : vector<304x1xf32>
    %19 = vector.broadcast %18 : vector<304x1xf32> to vector<304x128xf32>
    %20 = arith.mulf %11, %19 : vector<304x128xf32>
    %c0_10 = arith.constant 0 : index
    %c0_11 = arith.constant 0 : index
    %21 = vector.load %arg5[%c0_10, %c0_11] : memref<304x128xf32, #tpu.memory_space<vmem>>, vector<304x128xf32>
    tpu.vector_store %arg5[%c0_10, %c0_11], %20 {strides = array<i32>} : memref<304x128xf32, #tpu.memory_space<vmem>>, vector<304x128xf32>,
    %22 = tpu.iota {dimensions = array<i32: 1>} : vector<304x128xi32>
    %23 = vector.broadcast %1 : vector<304x1xi32> to vector<304x128xi32>
    %24 = arith.cmpi eq, %22, %23 : vector<304x128xi32>
    %25 = arith.extui %24 : vector<304x128xi1> to vector<304x128xi32>
    %26 = arith.sitofp %25 : vector<304x128xi32> to vector<304x128xf32>
    %c0_i32 = arith.constant 0 : i32
    %27 = vector.broadcast %c0_i32 : i32 to vector<304x1xi32>
    %28 = arith.cmpi sge, %1, %27 : vector<304x1xi32>
    %29 = arith.extui %28 : vector<304x1xi1> to vector<304x1xi32>
    %30 = arith.sitofp %29 : vector<304x1xi32> to vector<304x1xf32>
    %31 = vector.broadcast %8 : vector<304x1xf32> to vector<304x128xf32>
    %32 = arith.cmpf oeq, %6, %31 : vector<304x128xf32>
    %c128_i32 = arith.constant 128 : i32
    %33 = vector.broadcast %c128_i32 : i32 to vector<304x128xi32>
    %34 = arith.select %32, %22, %33 : vector<304x128xi1>, vector<304x128xi32>
    %cst_12 = arith.constant dense<2147483647> : vector<304xi32>
    %35 = vector.multi_reduction <minsi>, %34, %cst_12 [1] : vector<304x128xi32> to vector<304xi32>
    %36 = vector.shape_cast %35 : vector<304xi32> to vector<304x1xi32>
    %37 = arith.cmpi ne, %36, %1 : vector<304x1xi32>
    %38 = arith.extui %37 : vector<304x1xi1> to vector<304x1xi32>
    %39 = arith.sitofp %38 : vector<304x1xi32> to vector<304x1xf32>
    %40 = arith.mulf %26, %10 : vector<304x128xf32>
    %cst_13 = arith.constant dense<0.000000e+00> : vector<304xf32>
    %41 = vector.multi_reduction <add>, %40, %cst_13 [1] : vector<304x128xf32> to vector<304xf32>
    %42 = vector.shape_cast %41 : vector<304xf32> to vector<304x1xf32>
    %43 = math.log %13 : vector<304x1xf32>
    %44 = arith.mulf %30, %43 : vector<304x1xf32>
    %45 = arith.subf %44, %42 : vector<304x1xf32>
    %cst_14 = arith.constant dense<0.000000e+00> : vector<128xf32>
    %46 = vector.multi_reduction <add>, %26, %cst_14 [0] : vector<304x128xf32> to vector<128xf32>
    %47 = vector.shape_cast %46 : vector<128xf32> to vector<1x128xf32>
    %48 = vector.broadcast %39 : vector<304x1xf32> to vector<304x128xf32>
    %49 = arith.mulf %26, %48 : vector<304x128xf32>
    %cst_15 = arith.constant dense<0.000000e+00> : vector<128xf32>
    %50 = vector.multi_reduction <add>, %49, %cst_15 [0] : vector<304x128xf32> to vector<128xf32>
    %51 = vector.shape_cast %50 : vector<128xf32> to vector<1x128xf32>
    %52 = vector.broadcast %45 : vector<304x1xf32> to vector<304x128xf32>
    %53 = arith.mulf %26, %52 : vector<304x128xf32>
    %cst_16 = arith.constant dense<0.000000e+00> : vector<128xf32>
    %54 = vector.multi_reduction <add>, %53, %cst_16 [0] : vector<304x128xf32> to vector<128xf32>
    %55 = vector.shape_cast %54 : vector<128xf32> to vector<1x128xf32>
    %cst_17 = arith.constant 0.000000e+00 : f32
    %56 = vector.broadcast %cst_17 : f32 to vector<1x128xf32>
    %57 = arith.cmpf ogt, %51, %56 : vector<1x128xf32>
    %cst_18 = arith.constant 1.000000e+00 : f32
    %58 = vector.broadcast %cst_18 : f32 to vector<1x128xf32>
    %59 = arith.select %57, %51, %58 : vector<1x128xi1>, vector<1x128xf32>
    %cst_19 = arith.constant 0.000000e+00 : f32
    %60 = vector.broadcast %cst_19 : f32 to vector<1x128xf32>
    %61 = arith.cmpf ogt, %47, %60 : vector<1x128xf32>
    %cst_20 = arith.constant 1.000000e+00 : f32
    %62 = vector.broadcast %cst_20 : f32 to vector<1x128xf32>
    %63 = arith.select %61, %47, %62 : vector<1x128xi1>, vector<1x128xf32>
    %64 = arith.divf %59, %63 : vector<1x128xf32>
    %65 = arith.mulf %64, %55 : vector<1x128xf32>
    %66 = vector.shape_cast %65 : vector<1x128xf32> to vector<1x1x128xf32>
    %cst_21 = arith.constant dense<0.000000e+00> : vector<1xf32>
    %67 = vector.multi_reduction <add>, %66, %cst_21 [1, 2] : vector<1x1x128xf32> to vector<1xf32>
    %68 = vector.shape_cast %67 : vector<1xf32> to vector<1x1x1xf32>
    %69 = vector.extract %68[0, 0, 0] : f32 from vector<1x1x1xf32>
    %70 = arith.mulf %64, %47 : vector<1x128xf32>
    %71 = vector.shape_cast %70 : vector<1x128xf32> to vector<1x1x128xf32>
    %cst_22 = arith.constant dense<0.000000e+00> : vector<1xf32>
    %72 = vector.multi_reduction <add>, %71, %cst_22 [1, 2] : vector<1x1x128xf32> to vector<1xf32>
    %73 = vector.shape_cast %72 : vector<1xf32> to vector<1x1x1xf32>
    %74 = vector.extract %73[0, 0, 0] : f32 from vector<1x1x1xf32>
    %75 = arith.divf %69, %74 : f32
    %c0_23 = arith.constant 0 : index
    %c0_24 = arith.constant 0 : index
    %76 = memref.load %arg4[%c0_23, %c0_24] : memref<1x1xf32, #tpu.memory_space<smem>>
    %cst_25 = arith.constant 0.000000e+00 : f32
    %77 = arith.subf %cst_25, %76 : f32
    %78 = math.exp %77 : f32
    %cst_26 = arith.constant 2.000000e+00 : f32
    %79 = arith.mulf %cst_26, %78 : f32
    %80 = arith.mulf %79, %75 : f32
    %81 = arith.addf %80, %76 : f32
    %c0_27 = arith.constant 0 : index
    %c0_28 = arith.constant 0 : index
    %82 = memref.load %arg6[%c0_27, %c0_28] : memref<1x1xf32, #tpu.memory_space<smem>>
    memref.store %81, %arg6[%c0_27, %c0_28] : memref<1x1xf32, #tpu.memory_space<smem>>
    return
  }
}

</mosaic_0001>

<llo_original>
// kernel: tpu_custom_call.1
$region0: #{tpu_custom_call.1}
  #allocation0 [shape = 'u32[]', space=smem, size = 0x4, offset = 0x4, fixed_abs, tag = 'smem constant byte address 0x4 - core index']
  #allocation1 [shape = 'u32[72,128]{1,0:T(1,128)}', space=vmem, size = 0x9000, scoped, tag = 'internal scratch']
  #allocation2 [shape = 'f32[1,1]{1,0:T(1,128)S(6)}', space=smem, size = 0x200, scoped, tag = 'scoped memory for tpu_custom_call.1']
  %s0 = inlined_call_operand.vmem [shape: f32[304,32], index: 0, kind: input, shape index: {}]
  %s1 = inlined_call_operand.vmem [shape: s32[304,1], index: 1, kind: input, shape index: {}]
  %s2 = inlined_call_operand.vmem [shape: f32[32,128], index: 2, kind: input, shape index: {}]
  %s3 = inlined_call_operand.vmem [shape: f32[1,128], index: 3, kind: input, shape index: {}]
  %s4 = inlined_call_operand.<no memory space> [shape: f32[1,1], index: 4, kind: input, shape index: {}]
  %s5 = inlined_call_operand.hbm [shape: f32[304,128], index: 5, kind: output, shape index: {0}]
  %s6 = inlined_call_operand.hbm [shape: f32[1,1], index: 6, kind: output, shape index: {1}]
  %7 = xla_tuple %s5, %s6
  %s8 = sld [smem:[#allocation0]]
  $region38: #{tpu_custom_call.1} parent=0
    _
  %s10 = ssub.s32 1, %s8
  %s11 = scalar_select 0, %s10, %s8
  %12 = sst [smem:[#allocation2]] %s4
  $region1: #{tpu_custom_call.1} parent=0
    #allocation3 [shape = 'u8[155648]{0}', space=vmem, size = 0x26000, scoped, tag = 'output window, operand 0, single buffered']
    #allocation4 [shape = 's32[1]{0}', space=sflag, size = 0x4, scoped, tag = 'scoped memory for tpu_custom_call.1']
    #allocation5 [shape = 's32[1]{0}', space=sflag, size = 0x4, scoped, tag = 'scoped memory for tpu_custom_call.1']
    #allocation6 [shape = 'u8[512]{0}', space=smem, size = 0x200, scoped, tag = 'output window, operand 1, single buffered']
    %13 = vsyncpa [#allocation4], 0
    %14 = vsyncpa [#allocation5], 0
    // Predicated region
    $region2: #{tpu_custom_call.1} parent=1 // pred_check
      _
    $region3: #{tpu_custom_call.1} parent=1 // pred_check_branch
      %16 = sbr.rel (0) target = $region5
    $region4: #{tpu_custom_call.1} parent=1 // pred_region
      _
    $region5: #{tpu_custom_call.1} parent=1 // pred_fallthru
      _
    // Predicated region
    $region6: #{tpu_custom_call.1} parent=1 // pred_check
      _
    $region7: #{tpu_custom_call.1} parent=1 // pred_check_branch
      %18 = sbr.rel (0) target = $region9
    $region8: #{tpu_custom_call.1} parent=1 // pred_region
      _
    $region9: #{tpu_custom_call.1} parent=1 // pred_fallthru
      _
    // Predicated region
    $region10: #{tpu_custom_call.1} parent=1 // pred_check
      _
    $region11: #{tpu_custom_call.1} parent=1 // pred_check_branch
      %20 = sbr.rel (0) target = $region13
    $region12: #{tpu_custom_call.1} parent=1 // pred_region
      _
    $region13: #{tpu_custom_call.1} parent=1 // pred_fallthru
      _
    // Predicated region
    $region14: #{tpu_custom_call.1} parent=1 // pred_check
      _
    $region15: #{tpu_custom_call.1} parent=1 // pred_check_branch
      %22 = sbr.rel (0) target = $region17
    $region16: #{tpu_custom_call.1} parent=1 // pred_region
      _
    $region17: #{tpu_custom_call.1} parent=1 // pred_fallthru
      _
    // Predicated region
    $region18: #{tpu_custom_call.1} parent=1 // pred_check
      _
    $region19: #{tpu_custom_call.1} parent=1 // pred_check_branch
      %24 = sbr.rel (0) target = $region21
    $region20: #{tpu_custom_call.1} parent=1 // pred_region
      _
    $region21: #{tpu_custom_call.1} parent=1 // pred_fallthru
      _
    %v25 = vld [vmem:[%s0] sm:$0xff]
    %v26 = vld [vmem:[%s0 + $0x8] sm:$0xff]
    %v27 = vld [vmem:[%s0 + $0x10] sm:$0xff]
    %v28 = vld [vmem:[%s0 + $0x18] sm:$0xff]
    %v29 = vld [vmem:[%s0 + $0x20] sm:$0xff]
    %v30 = vld [vmem:[%s0 + $0x28] sm:$0xff]
    %v31 = vld [vmem:[%s0 + $0x30] sm:$0xff]
    %v32 = vld [vmem:[%s0 + $0x38] sm:$0xff]
    %v33 = vld [vmem:[%s0 + $0x40] sm:$0xff]
    %v34 = vld [vmem:[%s0 + $0x48] sm:$0xff]
    %v35 = vld [vmem:[%s0 + $0x50] sm:$0xff]
    %v36 = vld [vmem:[%s0 + $0x58] sm:$0xff]
    %v37 = vld [vmem:[%s0 + $0x60] sm:$0xff]
    %v38 = vld [vmem:[%s0 + $0x68] sm:$0xff]
    %v39 = vld [vmem:[%s0 + $0x70] sm:$0xff]
    %v40 = vld [vmem:[%s0 + $0x78] sm:$0xff]
    %v41 = vld [vmem:[%s0 + $0x80] sm:$0xff]
    %v42 = vld [vmem:[%s0 + $0x88] sm:$0xff]
    %v43 = vld [vmem:[%s0 + $0x90] sm:$0xff]
    %v44 = vld [vmem:[%s0 + $0x98] sm:$0xff]
    %v45 = vld [vmem:[%s0 + $0xa0] sm:$0xff]
    %v46 = vld [vmem:[%s0 + $0xa8] sm:$0xff]
    %v47 = vld [vmem:[%s0 + $0xb0] sm:$0xff]
    %v48 = vld [vmem:[%s0 + $0xb8] sm:$0xff]
    %v49 = vld [vmem:[%s0 + $0xc0] sm:$0xff]
    %v50 = vld [vmem:[%s0 + $0xc8] sm:$0xff]
    %v51 = vld [vmem:[%s0 + $0xd0] sm:$0xff]
    %v52 = vld [vmem:[%s0 + $0xd8] sm:$0xff]
    %v53 = vld [vmem:[%s0 + $0xe0] sm:$0xff]
    %v54 = vld [vmem:[%s0 + $0xe8] sm:$0xff]
    %v55 = vld [vmem:[%s0 + $0xf0] sm:$0xff]
    %v56 = vld [vmem:[%s0 + $0xf8] sm:$0xff]
    %v57 = vld [vmem:[%s0 + $0x100] sm:$0xff]
    %v58 = vld [vmem:[%s0 + $0x108] sm:$0xff]
    %v59 = vld [vmem:[%s0 + $0x110] sm:$0xff]
    %v60 = vld [vmem:[%s0 + $0x118] sm:$0xff]
    %v61 = vld [vmem:[%s0 + $0x120] sm:$0xff]
    %v62 = vld [vmem:[%s0 + $0x128] sm:$0xff]
    %v63 = vld [vmem:[%s1] sm:$0xff]
    %v64 = vld [vmem:[%s1 + $0x8] sm:$0xff]
    %v65 = vld [vmem:[%s1 + $0x10] sm:$0xff]
    %v66 = vld [vmem:[%s1 + $0x18] sm:$0xff]
    %v67 = vld [vmem:[%s1 + $0x20] sm:$0xff]
    %v68 = vld [vmem:[%s1 + $0x28] sm:$0xff]
    %v69 = vld [vmem:[%s1 + $0x30] sm:$0xff]
    %v70 = vld [vmem:[%s1 + $0x38] sm:$0xff]
    %v71 = vld [vmem:[%s1 + $0x40] sm:$0xff]
    %v72 = vld [vmem:[%s1 + $0x48] sm:$0xff]
    %v73 = vld [vmem:[%s1 + $0x50] sm:$0xff]
    %v74 = vld [vmem:[%s1 + $0x58] sm:$0xff]
    %v75 = vld [vmem:[%s1 + $0x60] sm:$0xff]
    %v76 = vld [vmem:[%s1 + $0x68] sm:$0xff]
    %v77 = vld [vmem:[%s1 + $0x70] sm:$0xff]
    %v78 = vld [vmem:[%s1 + $0x78] sm:$0xff]
    %v79 = vld [vmem:[%s1 + $0x80] sm:$0xff]
    %v80 = vld [vmem:[%s1 + $0x88] sm:$0xff]
    %v81 = vld [vmem:[%s1 + $0x90] sm:$0xff]
    %v82 = vld [vmem:[%s1 + $0x98] sm:$0xff]
    %v83 = vld [vmem:[%s1 + $0xa0] sm:$0xff]
    %v84 = vld [vmem:[%s1 + $0xa8] sm:$0xff]
    %v85 = vld [vmem:[%s1 + $0xb0] sm:$0xff]
    %v86 = vld [vmem:[%s1 + $0xb8] sm:$0xff]
    %v87 = vld [vmem:[%s1 + $0xc0] sm:$0xff]
    %v88 = vld [vmem:[%s1 + $0xc8] sm:$0xff]
    %v89 = vld [vmem:[%s1 + $0xd0] sm:$0xff]
    %v90 = vld [vmem:[%s1 + $0xd8] sm:$0xff]
    %v91 = vld [vmem:[%s1 + $0xe0] sm:$0xff]
    %v92 = vld [vmem:[%s1 + $0xe8] sm:$0xff]
    %v93 = vld [vmem:[%s1 + $0xf0] sm:$0xff]
    %v94 = vld [vmem:[%s1 + $0xf8] sm:$0xff]
    %v95 = vld [vmem:[%s1 + $0x100] sm:$0xff]
    %v96 = vld [vmem:[%s1 + $0x108] sm:$0xff]
    %v97 = vld [vmem:[%s1 + $0x110] sm:$0xff]
    %v98 = vld [vmem:[%s1 + $0x118] sm:$0xff]
    %v99 = vld [vmem:[%s1 + $0x120] sm:$0xff]
    %v100 = vld [vmem:[%s1 + $0x128] sm:$0xff]
    %v101 = vld [vmem:[%s2] sm:$0xff]
    %v102 = vld [vmem:[%s2 + $0x8] sm:$0xff]
    %v103 = vld [vmem:[%s2 + $0x10] sm:$0xff]
    %v104 = vld [vmem:[%s2 + $0x18] sm:$0xff]
    %v105 = vld [vmem:[%s3] sm:$0x1]
    %v107 = vperm.slane %v105, 0
    %vm109 = vcmask 261120
    %v111 = vsel %vm109, %v25, 0
    %v114 = vsel %vm109, %v26, 0
    %v117 = vsel %vm109, %v27, 0
    %v120 = vsel %vm109, %v28, 0
    %v123 = vsel %vm109, %v29, 0
    %v126 = vsel %vm109, %v30, 0
    %v129 = vsel %vm109, %v31, 0
    %v132 = vsel %vm109, %v32, 0
    %v135 = vsel %vm109, %v33, 0
    %v138 = vsel %vm109, %v34, 0
    %v141 = vsel %vm109, %v35, 0
    %v144 = vsel %vm109, %v36, 0
    %v147 = vsel %vm109, %v37, 0
    %v150 = vsel %vm109, %v38, 0
    %v153 = vsel %vm109, %v39, 0
    %v156 = vsel %vm109, %v40, 0
    %v159 = vsel %vm109, %v41, 0
    %v162 = vsel %vm109, %v42, 0
    %v165 = vsel %vm109, %v43, 0
    %v168 = vsel %vm109, %v44, 0
    %v171 = vsel %vm109, %v45, 0
    %v174 = vsel %vm109, %v46, 0
    %v177 = vsel %vm109, %v47, 0
    %v180 = vsel %vm109, %v48, 0
    %v183 = vsel %vm109, %v49, 0
    %v186 = vsel %vm109, %v50, 0
    %v189 = vsel %vm109, %v51, 0
    %v192 = vsel %vm109, %v52, 0
    %v195 = vsel %vm109, %v53, 0
    %v198 = vsel %vm109, %v54, 0
    %v201 = vsel %vm109, %v55, 0
    %v204 = vsel %vm109, %v56, 0
    %v207 = vsel %vm109, %v57, 0
    %v210 = vsel %vm109, %v58, 0
    %v213 = vsel %vm109, %v59, 0
    %v216 = vsel %vm109, %v60, 0
    %v219 = vsel %vm109, %v61, 0
    %v222 = vsel %vm109, %v62, 0
    %224 = vmatpush.msra.mxu0 0.0
    %225 = vmatpush.msra.mxu0 0.0
    %226 = vmatpush.msra.mxu0 0.0
    %227 = vmatpush.msra.mxu0 0.0
    %228 = vmatpush.msra.mxu0 0.0
    %229 = vmatpush.msra.mxu0 0.0
    %230 = vmatpush.msra.mxu0 0.0
    %231 = vmatpush.msra.mxu0 0.0
    %232 = vmatpush.msra.mxu0 0.0
    %233 = vmatpush.msra.mxu0 0.0
    %234 = vmatpush.msra.mxu0 0.0
    %235 = vmatpush.msra.mxu0 0.0
    %236 = vmatpush.msra.mxu0 %v104
    %237 = vmatpush.msra.mxu0 %v103
    %238 = vmatpush.msra.mxu0 %v102
    %239 = vmatpush.msra.mxu0 %v101
    %240 = vmatmul.f32.gmra.mxu0 %v111
    %v241 = vpop.f32.mrf.mxu0
    %v242 = vadd.f32 %v107, %v241
    %243 = vmatmul.f32.gmra.mxu0 %v114
    %v244 = vpop.f32.mrf.mxu0
    %v245 = vadd.f32 %v107, %v244
    %246 = vmatmul.f32.gmra.mxu0 %v117
    %v247 = vpop.f32.mrf.mxu0
    %v248 = vadd.f32 %v107, %v247
    %249 = vmatmul.f32.gmra.mxu0 %v120
    %v250 = vpop.f32.mrf.mxu0
    %v251 = vadd.f32 %v107, %v250
    %252 = vmatmul.f32.gmra.mxu0 %v123
    %v253 = vpop.f32.mrf.mxu0
    %v254 = vadd.f32 %v107, %v253
    %255 = vmatmul.f32.gmra.mxu0 %v126
    %v256 = vpop.f32.mrf.mxu0
    %v257 = vadd.f32 %v107, %v256
    %258 = vmatmul.f32.gmra.mxu0 %v129
    %v259 = vpop.f32.mrf.mxu0
    %v260 = vadd.f32 %v107, %v259
    %261 = vmatmul.f32.gmra.mxu0 %v132
    %v262 = vpop.f32.mrf.mxu0
    %v263 = vadd.f32 %v107, %v262
    %264 = vmatmul.f32.gmra.mxu0 %v135
    %v265 = vpop.f32.mrf.mxu0
    %v266 = vadd.f32 %v107, %v265
    %267 = vmatmul.f32.gmra.mxu0 %v138
    %v268 = vpop.f32.mrf.mxu0
    %v269 = vadd.f32 %v107, %v268
    %270 = vmatmul.f32.gmra.mxu0 %v141
    %v271 = vpop.f32.mrf.mxu0
    %v272 = vadd.f32 %v107, %v271
    %273 = vmatmul.f32.gmra.mxu0 %v144
    %v274 = vpop.f32.mrf.mxu0
    %v275 = vadd.f32 %v107, %v274
    %276 = vmatmul.f32.gmra.mxu0 %v147
    %v277 = vpop.f32.mrf.mxu0
    %v278 = vadd.f32 %v107, %v277
    %279 = vmatmul.f32.gmra.mxu0 %v150
    %v280 = vpop.f32.mrf.mxu0
    %v281 = vadd.f32 %v107, %v280
    %282 = vmatmul.f32.gmra.mxu0 %v153
    %v283 = vpop.f32.mrf.mxu0
    %v284 = vadd.f32 %v107, %v283
    %285 = vmatmul.f32.gmra.mxu0 %v156
    %v286 = vpop.f32.mrf.mxu0
    %v287 = vadd.f32 %v107, %v286
    %288 = vmatmul.f32.gmra.mxu0 %v159
    %v289 = vpop.f32.mrf.mxu0
    %v290 = vadd.f32 %v107, %v289
    %291 = vmatmul.f32.gmra.mxu0 %v162
    %v292 = vpop.f32.mrf.mxu0
    %v293 = vadd.f32 %v107, %v292
    %294 = vmatmul.f32.gmra.mxu0 %v165
    %v295 = vpop.f32.mrf.mxu0
    %v296 = vadd.f32 %v107, %v295
    %297 = vmatmul.f32.gmra.mxu0 %v168
    %v298 = vpop.f32.mrf.mxu0
    %v299 = vadd.f32 %v107, %v298
    %300 = vmatmul.f32.gmra.mxu0 %v171
    %v301 = vpop.f32.mrf.mxu0
    %v302 = vadd.f32 %v107, %v301
    %303 = vmatmul.f32.gmra.mxu0 %v174
    %v304 = vpop.f32.mrf.mxu0
    %v305 = vadd.f32 %v107, %v304
    %306 = vmatmul.f32.gmra.mxu0 %v177
    %v307 = vpop.f32.mrf.mxu0
    %v308 = vadd.f32 %v107, %v307
    %309 = vmatmul.f32.gmra.mxu0 %v180
    %v310 = vpop.f32.mrf.mxu0
    %v311 = vadd.f32 %v107, %v310
    %312 = vmatmul.f32.gmra.mxu0 %v183
    %v313 = vpop.f32.mrf.mxu0
    %v314 = vadd.f32 %v107, %v313
    %315 = vmatmul.f32.gmra.mxu0 %v186
    %v316 = vpop.f32.mrf.mxu0
    %v317 = vadd.f32 %v107, %v316
    %318 = vmatmul.f32.gmra.mxu0 %v189
    %v319 = vpop.f32.mrf.mxu0
    %v320 = vadd.f32 %v107, %v319
    %321 = vmatmul.f32.gmra.mxu0 %v192
    %v322 = vpop.f32.mrf.mxu0
    %v323 = vadd.f32 %v107, %v322
    %324 = vmatmul.f32.gmra.mxu0 %v195
    %v325 = vpop.f32.mrf.mxu0
    %v326 = vadd.f32 %v107, %v325
    %327 = vmatmul.f32.gmra.mxu0 %v198
    %v328 = vpop.f32.mrf.mxu0
    %v329 = vadd.f32 %v107, %v328
    %330 = vmatmul.f32.gmra.mxu0 %v201
    %v331 = vpop.f32.mrf.mxu0
    %v332 = vadd.f32 %v107, %v331
    %333 = vmatmul.f32.gmra.mxu0 %v204
    %v334 = vpop.f32.mrf.mxu0
    %v335 = vadd.f32 %v107, %v334
    %336 = vmatmul.f32.gmra.mxu0 %v207
    %v337 = vpop.f32.mrf.mxu0
    %v338 = vadd.f32 %v107, %v337
    %339 = vmatmul.f32.gmra.mxu0 %v210
    %v340 = vpop.f32.mrf.mxu0
    %v341 = vadd.f32 %v107, %v340
    %342 = vmatmul.f32.gmra.mxu0 %v213
    %v343 = vpop.f32.mrf.mxu0
    %v344 = vadd.f32 %v107, %v343
    %345 = vmatmul.f32.gmra.mxu0 %v216
    %v346 = vpop.f32.mrf.mxu0
    %v347 = vadd.f32 %v107, %v346
    %348 = vmatmul.f32.gmra.mxu0 %v219
    %v349 = vpop.f32.mrf.mxu0
    %v350 = vadd.f32 %v107, %v349
    %351 = vmatmul.f32.gmra.mxu0 %v222
    %v352 = vpop.f32.mrf.mxu0
    %v353 = vadd.f32 %v107, %v352
    %354 = vdwg.mxu0
    %355 = vmax.xlane.f32.xlu0 %v242
    %v356 = vpop.xlane.xlu0 %355
    %357 = vmax.xlane.f32.xlu0 %v245
    %v358 = vpop.xlane.xlu0 %357
    %359 = vmax.xlane.f32.xlu0 %v248
    %v360 = vpop.xlane.xlu0 %359
    %361 = vmax.xlane.f32.xlu0 %v251
    %v362 = vpop.xlane.xlu0 %361
    %363 = vmax.xlane.f32.xlu0 %v254
    %v364 = vpop.xlane.xlu0 %363
    %365 = vmax.xlane.f32.xlu0 %v257
    %v366 = vpop.xlane.xlu0 %365
    %367 = vmax.xlane.f32.xlu0 %v260
    %v368 = vpop.xlane.xlu0 %367
    %369 = vmax.xlane.f32.xlu0 %v263
    %v370 = vpop.xlane.xlu0 %369
    %371 = vmax.xlane.f32.xlu0 %v266
    %v372 = vpop.xlane.xlu0 %371
    %373 = vmax.xlane.f32.xlu0 %v269
    %v374 = vpop.xlane.xlu0 %373
    %375 = vmax.xlane.f32.xlu0 %v272
    %v376 = vpop.xlane.xlu0 %375
    %377 = vmax.xlane.f32.xlu0 %v275
    %v378 = vpop.xlane.xlu0 %377
    %379 = vmax.xlane.f32.xlu0 %v278
    %v380 = vpop.xlane.xlu0 %379
    %381 = vmax.xlane.f32.xlu0 %v281
    %v382 = vpop.xlane.xlu0 %381
    %383 = vmax.xlane.f32.xlu0 %v284
    %v384 = vpop.xlane.xlu0 %383
    %385 = vmax.xlane.f32.xlu0 %v287
    %v386 = vpop.xlane.xlu0 %385
    %387 = vmax.xlane.f32.xlu0 %v290
    %v388 = vpop.xlane.xlu0 %387
    %389 = vmax.xlane.f32.xlu0 %v293
    %v390 = vpop.xlane.xlu0 %389
    %391 = vmax.xlane.f32.xlu0 %v296
    %v392 = vpop.xlane.xlu0 %391
    %393 = vmax.xlane.f32.xlu0 %v299
    %v394 = vpop.xlane.xlu0 %393
    %395 = vmax.xlane.f32.xlu0 %v302
    %v396 = vpop.xlane.xlu0 %395
    %397 = vmax.xlane.f32.xlu0 %v305
    %v398 = vpop.xlane.xlu0 %397
    %399 = vmax.xlane.f32.xlu0 %v308
    %v400 = vpop.xlane.xlu0 %399
    %401 = vmax.xlane.f32.xlu0 %v311
    %v402 = vpop.xlane.xlu0 %401
    %403 = vmax.xlane.f32.xlu0 %v314
    %v404 = vpop.xlane.xlu0 %403
    %405 = vmax.xlane.f32.xlu0 %v317
    %v406 = vpop.xlane.xlu0 %405
    %407 = vmax.xlane.f32.xlu0 %v320
    %v408 = vpop.xlane.xlu0 %407
    %409 = vmax.xlane.f32.xlu0 %v323
    %v410 = vpop.xlane.xlu0 %409
    %411 = vmax.xlane.f32.xlu0 %v326
    %v412 = vpop.xlane.xlu0 %411
    %413 = vmax.xlane.f32.xlu0 %v329
    %v414 = vpop.xlane.xlu0 %413
    %415 = vmax.xlane.f32.xlu0 %v332
    %v416 = vpop.xlane.xlu0 %415
    %417 = vmax.xlane.f32.xlu0 %v335
    %v418 = vpop.xlane.xlu0 %417
    %419 = vmax.xlane.f32.xlu0 %v338
    %v420 = vpop.xlane.xlu0 %419
    %421 = vmax.xlane.f32.xlu0 %v341
    %v422 = vpop.xlane.xlu0 %421
    %423 = vmax.xlane.f32.xlu0 %v344
    %v424 = vpop.xlane.xlu0 %423
    %425 = vmax.xlane.f32.xlu0 %v347
    %v426 = vpop.xlane.xlu0 %425
    %427 = vmax.xlane.f32.xlu0 %v350
    %v428 = vpop.xlane.xlu0 %427
    %429 = vmax.xlane.f32.xlu0 %v353
    %v430 = vpop.xlane.xlu0 %429
    %v431 = vsub.f32 %v242, %v356
    %v432 = vsub.f32 %v245, %v358
    %v433 = vsub.f32 %v248, %v360
    %v434 = vsub.f32 %v251, %v362
    %v435 = vsub.f32 %v254, %v364
    %v436 = vsub.f32 %v257, %v366
    %v437 = vsub.f32 %v260, %v368
    %v438 = vsub.f32 %v263, %v370
    %v439 = vsub.f32 %v266, %v372
    %v440 = vsub.f32 %v269, %v374
    %v441 = vsub.f32 %v272, %v376
    %v442 = vsub.f32 %v275, %v378
    %v443 = vsub.f32 %v278, %v380
    %v444 = vsub.f32 %v281, %v382
    %v445 = vsub.f32 %v284, %v384
    %v446 = vsub.f32 %v287, %v386
    %v447 = vsub.f32 %v290, %v388
    %v448 = vsub.f32 %v293, %v390
    %v449 = vsub.f32 %v296, %v392
    %v450 = vsub.f32 %v299, %v394
    %v451 = vsub.f32 %v302, %v396
    %v452 = vsub.f32 %v305, %v398
    %v453 = vsub.f32 %v308, %v400
    %v454 = vsub.f32 %v311, %v402
    %v455 = vsub.f32 %v314, %v404
    %v456 = vsub.f32 %v317, %v406
    %v457 = vsub.f32 %v320, %v408
    %v458 = vsub.f32 %v323, %v410
    %v459 = vsub.f32 %v326, %v412
    %v460 = vsub.f32 %v329, %v414
    %v461 = vsub.f32 %v332, %v416
    %v462 = vsub.f32 %v335, %v418
    %v463 = vsub.f32 %v338, %v420
    %v464 = vsub.f32 %v341, %v422
    %v465 = vsub.f32 %v344, %v424
    %v466 = vsub.f32 %v347, %v426
    %v467 = vsub.f32 %v350, %v428
    %v468 = vsub.f32 %v353, %v430
    %v469 = vmul.f32 %v431, 1.442695
    %v470 = vpow.pop %v469
    %v471 = vmul.f32 %v432, 1.442695
    %v472 = vpow.pop %v471
    %v473 = vmul.f32 %v433, 1.442695
    %v474 = vpow.pop %v473
    %v475 = vmul.f32 %v434, 1.442695
    %v476 = vpow.pop %v475
    %v477 = vmul.f32 %v435, 1.442695
    %v478 = vpow.pop %v477
    %v479 = vmul.f32 %v436, 1.442695
    %v480 = vpow.pop %v479
    %v481 = vmul.f32 %v437, 1.442695
    %v482 = vpow.pop %v481
    %v483 = vmul.f32 %v438, 1.442695
    %v484 = vpow.pop %v483
    %v485 = vmul.f32 %v439, 1.442695
    %v486 = vpow.pop %v485
    %v487 = vmul.f32 %v440, 1.442695
    %v488 = vpow.pop %v487
    %v489 = vmul.f32 %v441, 1.442695
    %v490 = vpow.pop %v489
    %v491 = vmul.f32 %v442, 1.442695
    %v492 = vpow.pop %v491
    %v493 = vmul.f32 %v443, 1.442695
    %v494 = vpow.pop %v493
    %v495 = vmul.f32 %v444, 1.442695
    %v496 = vpow.pop %v495
    %v497 = vmul.f32 %v445, 1.442695
    %v498 = vpow.pop %v497
    %v499 = vmul.f32 %v446, 1.442695
    %v500 = vpow.pop %v499
    %v501 = vmul.f32 %v447, 1.442695
    %v502 = vpow.pop %v501
    %v503 = vmul.f32 %v448, 1.442695
    %v504 = vpow.pop %v503
    %v505 = vmul.f32 %v449, 1.442695
    %v506 = vpow.pop %v505
    %v507 = vmul.f32 %v450, 1.442695
    %v508 = vpow.pop %v507
    %v509 = vmul.f32 %v451, 1.442695
    %v510 = vpow.pop %v509
    %v511 = vmul.f32 %v452, 1.442695
    %v512 = vpow.pop %v511
    %v513 = vmul.f32 %v453, 1.442695
    %v514 = vpow.pop %v513
    %v515 = vmul.f32 %v454, 1.442695
    %v516 = vpow.pop %v515
    %v517 = vmul.f32 %v455, 1.442695
    %v518 = vpow.pop %v517
    %v519 = vmul.f32 %v456, 1.442695
    %v520 = vpow.pop %v519
    %v521 = vmul.f32 %v457, 1.442695
    %v522 = vpow.pop %v521
    %v523 = vmul.f32 %v458, 1.442695
    %v524 = vpow.pop %v523
    %v525 = vmul.f32 %v459, 1.442695
    %v526 = vpow.pop %v525
    %v527 = vmul.f32 %v460, 1.442695
    %v528 = vpow.pop %v527
    %v529 = vmul.f32 %v461, 1.442695
    %v530 = vpow.pop %v529
    %v531 = vmul.f32 %v462, 1.442695
    %v532 = vpow.pop %v531
    %v533 = vmul.f32 %v463, 1.442695
    %v534 = vpow.pop %v533
    %v535 = vmul.f32 %v464, 1.442695
    %v536 = vpow.pop %v535
    %v537 = vmul.f32 %v465, 1.442695
    %v538 = vpow.pop %v537
    %v539 = vmul.f32 %v466, 1.442695
    %v540 = vpow.pop %v539
    %v541 = vmul.f32 %v467, 1.442695
    %v542 = vpow.pop %v541
    %v543 = vmul.f32 %v468, 1.442695
    %v544 = vpow.pop %v543
    %545 = vadd.xlane.f32.xlu0 %v470
    %v546 = vpop.xlane.xlu0 %545
    %547 = vadd.xlane.f32.xlu0 %v472
    %v548 = vpop.xlane.xlu0 %547
    %549 = vadd.xlane.f32.xlu0 %v474
    %v550 = vpop.xlane.xlu0 %549
    %551 = vadd.xlane.f32.xlu0 %v476
    %v552 = vpop.xlane.xlu0 %551
    %553 = vadd.xlane.f32.xlu0 %v478
    %v554 = vpop.xlane.xlu0 %553
    %555 = vadd.xlane.f32.xlu0 %v480
    %v556 = vpop.xlane.xlu0 %555
    %557 = vadd.xlane.f32.xlu0 %v482
    %v558 = vpop.xlane.xlu0 %557
    %559 = vadd.xlane.f32.xlu0 %v484
    %v560 = vpop.xlane.xlu0 %559
    %561 = vadd.xlane.f32.xlu0 %v486
    %v562 = vpop.xlane.xlu0 %561
    %563 = vadd.xlane.f32.xlu0 %v488
    %v564 = vpop.xlane.xlu0 %563
    %565 = vadd.xlane.f32.xlu0 %v490
    %v566 = vpop.xlane.xlu0 %565
    %567 = vadd.xlane.f32.xlu0 %v492
    %v568 = vpop.xlane.xlu0 %567
    %569 = vadd.xlane.f32.xlu0 %v494
    %v570 = vpop.xlane.xlu0 %569
    %571 = vadd.xlane.f32.xlu0 %v496
    %v572 = vpop.xlane.xlu0 %571
    %573 = vadd.xlane.f32.xlu0 %v498
    %v574 = vpop.xlane.xlu0 %573
    %575 = vadd.xlane.f32.xlu0 %v500
    %v576 = vpop.xlane.xlu0 %575
    %577 = vadd.xlane.f32.xlu0 %v502
    %v578 = vpop.xlane.xlu0 %577
    %579 = vadd.xlane.f32.xlu0 %v504
    %v580 = vpop.xlane.xlu0 %579
    %581 = vadd.xlane.f32.xlu0 %v506
    %v582 = vpop.xlane.xlu0 %581
    %583 = vadd.xlane.f32.xlu0 %v508
    %v584 = vpop.xlane.xlu0 %583
    %585 = vadd.xlane.f32.xlu0 %v510
    %v586 = vpop.xlane.xlu0 %585
    %587 = vadd.xlane.f32.xlu0 %v512
    %v588 = vpop.xlane.xlu0 %587
    %589 = vadd.xlane.f32.xlu0 %v514
    %v590 = vpop.xlane.xlu0 %589
    %591 = vadd.xlane.f32.xlu0 %v516
    %v592 = vpop.xlane.xlu0 %591
    %593 = vadd.xlane.f32.xlu0 %v518
    %v594 = vpop.xlane.xlu0 %593
    %595 = vadd.xlane.f32.xlu0 %v520
    %v596 = vpop.xlane.xlu0 %595
    %597 = vadd.xlane.f32.xlu0 %v522
    %v598 = vpop.xlane.xlu0 %597
    %599 = vadd.xlane.f32.xlu0 %v524
    %v600 = vpop.xlane.xlu0 %599
    %601 = vadd.xlane.f32.xlu0 %v526
    %v602 = vpop.xlane.xlu0 %601
    %603 = vadd.xlane.f32.xlu0 %v528
    %v604 = vpop.xlane.xlu0 %603
    %605 = vadd.xlane.f32.xlu0 %v530
    %v606 = vpop.xlane.xlu0 %605
    %607 = vadd.xlane.f32.xlu0 %v532
    %v608 = vpop.xlane.xlu0 %607
    %609 = vadd.xlane.f32.xlu0 %v534
    %v610 = vpop.xlane.xlu0 %609
    %611 = vadd.xlane.f32.xlu0 %v536
    %v612 = vpop.xlane.xlu0 %611
    %613 = vadd.xlane.f32.xlu0 %v538
    %v614 = vpop.xlane.xlu0 %613
    %615 = vadd.xlane.f32.xlu0 %v540
    %v616 = vpop.xlane.xlu0 %615
    %617 = vadd.xlane.f32.xlu0 %v542
    %v618 = vpop.xlane.xlu0 %617
    %619 = vadd.xlane.f32.xlu0 %v544
    %v620 = vpop.xlane.xlu0 %619
    %v621 = vrcp.pop %v546
    %v622 = vrcp.pop %v548
    %v623 = vrcp.pop %v550
    %v624 = vrcp.pop %v552
    %v625 = vrcp.pop %v554
    %v626 = vrcp.pop %v556
    %v627 = vrcp.pop %v558
    %v628 = vrcp.pop %v560
    %v629 = vrcp.pop %v562
    %v630 = vrcp.pop %v564
    %v631 = vrcp.pop %v566
    %v632 = vrcp.pop %v568
    %v633 = vrcp.pop %v570
    %v634 = vrcp.pop %v572
    %v635 = vrcp.pop %v574
    %v636 = vrcp.pop %v576
    %v637 = vrcp.pop %v578
    %v638 = vrcp.pop %v580
    %v639 = vrcp.pop %v582
    %v640 = vrcp.pop %v584
    %v641 = vrcp.pop %v586
    %v642 = vrcp.pop %v588
    %v643 = vrcp.pop %v590
    %v644 = vrcp.pop %v592
    %v645 = vrcp.pop %v594
    %v646 = vrcp.pop %v596
    %v647 = vrcp.pop %v598
    %v648 = vrcp.pop %v600
    %v649 = vrcp.pop %v602
    %v650 = vrcp.pop %v604
    %v651 = vrcp.pop %v606
    %v652 = vrcp.pop %v608
    %v653 = vrcp.pop %v610
    %v654 = vrcp.pop %v612
    %v655 = vrcp.pop %v614
    %v656 = vrcp.pop %v616
    %v657 = vrcp.pop %v618
    %v658 = vrcp.pop %v620
    %v659 = vmul.f32 %v546, %v621
    %v660 = vmul.f32 %v548, %v622
    %v661 = vmul.f32 %v550, %v623
    %v662 = vmul.f32 %v552, %v624
    %v663 = vmul.f32 %v554, %v625
    %v664 = vmul.f32 %v556, %v626
    %v665 = vmul.f32 %v558, %v627
    %v666 = vmul.f32 %v560, %v628
    %v667 = vmul.f32 %v562, %v629
    %v668 = vmul.f32 %v564, %v630
    %v669 = vmul.f32 %v566, %v631
    %v670 = vmul.f32 %v568, %v632
    %v671 = vmul.f32 %v570, %v633
    %v672 = vmul.f32 %v572, %v634
    %v673 = vmul.f32 %v574, %v635
    %v674 = vmul.f32 %v576, %v636
    %v675 = vmul.f32 %v578, %v637
    %v676 = vmul.f32 %v580, %v638
    %v677 = vmul.f32 %v582, %v639
    %v678 = vmul.f32 %v584, %v640
    %v679 = vmul.f32 %v586, %v641
    %v680 = vmul.f32 %v588, %v642
    %v681 = vmul.f32 %v590, %v643
    %v682 = vmul.f32 %v592, %v644
    %v683 = vmul.f32 %v594, %v645
    %v684 = vmul.f32 %v596, %v646
    %v685 = vmul.f32 %v598, %v647
    %v686 = vmul.f32 %v600, %v648
    %v687 = vmul.f32 %v602, %v649
    %v688 = vmul.f32 %v604, %v650
    %v689 = vmul.f32 %v606, %v651
    %v690 = vmul.f32 %v608, %v652
    %v691 = vmul.f32 %v610, %v653
    %v692 = vmul.f32 %v612, %v654
    %v693 = vmul.f32 %v614, %v655
    %v694 = vmul.f32 %v616, %v656
    %v695 = vmul.f32 %v618, %v657
    %v696 = vmul.f32 %v620, %v658
    %v697 = vsub.f32 2.0, %v659
    %v698 = vsub.f32 2.0, %v660
    %v699 = vsub.f32 2.0, %v661
    %v700 = vsub.f32 2.0, %v662
    %v701 = vsub.f32 2.0, %v663
    %v702 = vsub.f32 2.0, %v664
    %v703 = vsub.f32 2.0, %v665
    %v704 = vsub.f32 2.0, %v666
    %v705 = vsub.f32 2.0, %v667
    %v706 = vsub.f32 2.0, %v668
    %v707 = vsub.f32 2.0, %v669
    %v708 = vsub.f32 2.0, %v670
    %v709 = vsub.f32 2.0, %v671
    %v710 = vsub.f32 2.0, %v672
    %v711 = vsub.f32 2.0, %v673
    %v712 = vsub.f32 2.0, %v674
    %v713 = vsub.f32 2.0, %v675
    %v714 = vsub.f32 2.0, %v676
    %v715 = vsub.f32 2.0, %v677
    %v716 = vsub.f32 2.0, %v678
    %v717 = vsub.f32 2.0, %v679
    %v718 = vsub.f32 2.0, %v680
    %v719 = vsub.f32 2.0, %v681
    %v720 = vsub.f32 2.0, %v682
    %v721 = vsub.f32 2.0, %v683
    %v722 = vsub.f32 2.0, %v684
    %v723 = vsub.f32 2.0, %v685
    %v724 = vsub.f32 2.0, %v686
    %v725 = vsub.f32 2.0, %v687
    %v726 = vsub.f32 2.0, %v688
    %v727 = vsub.f32 2.0, %v689
    %v728 = vsub.f32 2.0, %v690
    %v729 = vsub.f32 2.0, %v691
    %v730 = vsub.f32 2.0, %v692
    %v731 = vsub.f32 2.0, %v693
    %v732 = vsub.f32 2.0, %v694
    %v733 = vsub.f32 2.0, %v695
    %v734 = vsub.f32 2.0, %v696
    %v735 = vmul.f32 %v621, %v697
    %v736 = vmul.f32 %v622, %v698
    %v737 = vmul.f32 %v623, %v699
    %v738 = vmul.f32 %v624, %v700
    %v739 = vmul.f32 %v625, %v701
    %v740 = vmul.f32 %v626, %v702
    %v741 = vmul.f32 %v627, %v703
    %v742 = vmul.f32 %v628, %v704
    %v743 = vmul.f32 %v629, %v705
    %v744 = vmul.f32 %v630, %v706
    %v745 = vmul.f32 %v631, %v707
    %v746 = vmul.f32 %v632, %v708
    %v747 = vmul.f32 %v633, %v709
    %v748 = vmul.f32 %v634, %v710
    %v749 = vmul.f32 %v635, %v711
    %v750 = vmul.f32 %v636, %v712
    %v751 = vmul.f32 %v637, %v713
    %v752 = vmul.f32 %v638, %v714
    %v753 = vmul.f32 %v639, %v715
    %v754 = vmul.f32 %v640, %v716
    %v755 = vmul.f32 %v641, %v717
    %v756 = vmul.f32 %v642, %v718
    %v757 = vmul.f32 %v643, %v719
    %v758 = vmul.f32 %v644, %v720
    %v759 = vmul.f32 %v645, %v721
    %v760 = vmul.f32 %v646, %v722
    %v761 = vmul.f32 %v647, %v723
    %v762 = vmul.f32 %v648, %v724
    %v763 = vmul.f32 %v649, %v725
    %v764 = vmul.f32 %v650, %v726
    %v765 = vmul.f32 %v651, %v727
    %v766 = vmul.f32 %v652, %v728
    %v767 = vmul.f32 %v653, %v729
    %v768 = vmul.f32 %v654, %v730
    %v769 = vmul.f32 %v655, %v731
    %v770 = vmul.f32 %v656, %v732
    %v771 = vmul.f32 %v657, %v733
    %v772 = vmul.f32 %v658, %v734
    %v773 = vmul.f32 %v470, %v735
    %v774 = vmul.f32 %v472, %v736
    %v775 = vmul.f32 %v474, %v737
    %v776 = vmul.f32 %v476, %v738
    %v777 = vmul.f32 %v478, %v739
    %v778 = vmul.f32 %v480, %v740
    %v779 = vmul.f32 %v482, %v741
    %v780 = vmul.f32 %v484, %v742
    %v781 = vmul.f32 %v486, %v743
    %v782 = vmul.f32 %v488, %v744
    %v783 = vmul.f32 %v490, %v745
    %v784 = vmul.f32 %v492, %v746
    %v785 = vmul.f32 %v494, %v747
    %v786 = vmul.f32 %v496, %v748
    %v787 = vmul.f32 %v498, %v749
    %v788 = vmul.f32 %v500, %v750
    %v789 = vmul.f32 %v502, %v751
    %v790 = vmul.f32 %v504, %v752
    %v791 = vmul.f32 %v506, %v753
    %v792 = vmul.f32 %v508, %v754
    %v793 = vmul.f32 %v510, %v755
    %v794 = vmul.f32 %v512, %v756
    %v795 = vmul.f32 %v514, %v757
    %v796 = vmul.f32 %v516, %v758
    %v797 = vmul.f32 %v518, %v759
    %v798 = vmul.f32 %v520, %v760
    %v799 = vmul.f32 %v522, %v761
    %v800 = vmul.f32 %v524, %v762
    %v801 = vmul.f32 %v526, %v763
    %v802 = vmul.f32 %v528, %v764
    %v803 = vmul.f32 %v530, %v765
    %v804 = vmul.f32 %v532, %v766
    %v805 = vmul.f32 %v534, %v767
    %v806 = vmul.f32 %v536, %v768
    %v807 = vmul.f32 %v538, %v769
    %v808 = vmul.f32 %v540, %v770
    %v809 = vmul.f32 %v542, %v771
    %v810 = vmul.f32 %v544, %v772
    %811 = vst [vmem:[#allocation3] sm:$0xff] %v773
    %812 = vst [vmem:[#allocation3 + $0x8] sm:$0xff] %v774
    %813 = vst [vmem:[#allocation3 + $0x10] sm:$0xff] %v775
    %814 = vst [vmem:[#allocation3 + $0x18] sm:$0xff] %v776
    %815 = vst [vmem:[#allocation3 + $0x20] sm:$0xff] %v777
    %816 = vst [vmem:[#allocation3 + $0x28] sm:$0xff] %v778
    %817 = vst [vmem:[#allocation3 + $0x30] sm:$0xff] %v779
    %818 = vst [vmem:[#allocation3 + $0x38] sm:$0xff] %v780
    %819 = vst [vmem:[#allocation3 + $0x40] sm:$0xff] %v781
    %820 = vst [vmem:[#allocation3 + $0x48] sm:$0xff] %v782
    %821 = vst [vmem:[#allocation3 + $0x50] sm:$0xff] %v783
    %822 = vst [vmem:[#allocation3 + $0x58] sm:$0xff] %v784
    %823 = vst [vmem:[#allocation3 + $0x60] sm:$0xff] %v785
    %824 = vst [vmem:[#allocation3 + $0x68] sm:$0xff] %v786
    %825 = vst [vmem:[#allocation3 + $0x70] sm:$0xff] %v787
    %826 = vst [vmem:[#allocation3 + $0x78] sm:$0xff] %v788
    %827 = vst [vmem:[#allocation3 + $0x80] sm:$0xff] %v789
    %828 = vst [vmem:[#allocation3 + $0x88] sm:$0xff] %v790
    %829 = vst [vmem:[#allocation3 + $0x90] sm:$0xff] %v791
    %830 = vst [vmem:[#allocation3 + $0x98] sm:$0xff] %v792
    %831 = vst [vmem:[#allocation3 + $0xa0] sm:$0xff] %v793
    %832 = vst [vmem:[#allocation3 + $0xa8] sm:$0xff] %v794
    %833 = vst [vmem:[#allocation3 + $0xb0] sm:$0xff] %v795
    %834 = vst [vmem:[#allocation3 + $0xb8] sm:$0xff] %v796
    %835 = vst [vmem:[#allocation3 + $0xc0] sm:$0xff] %v797
    %836 = vst [vmem:[#allocation3 + $0xc8] sm:$0xff] %v798
    %837 = vst [vmem:[#allocation3 + $0xd0] sm:$0xff] %v799
    %838 = vst [vmem:[#allocation3 + $0xd8] sm:$0xff] %v800
    %839 = vst [vmem:[#allocation3 + $0xe0] sm:$0xff] %v801
    %840 = vst [vmem:[#allocation3 + $0xe8] sm:$0xff] %v802
    %841 = vst [vmem:[#allocation3 + $0xf0] sm:$0xff] %v803
    %842 = vst [vmem:[#allocation3 + $0xf8] sm:$0xff] %v804
    %843 = vst [vmem:[#allocation3 + $0x100] sm:$0xff] %v805
    %844 = vst [vmem:[#allocation3 + $0x108] sm:$0xff] %v806
    %845 = vst [vmem:[#allocation3 + $0x110] sm:$0xff] %v807
    %846 = vst [vmem:[#allocation3 + $0x118] sm:$0xff] %v808
    %847 = vst [vmem:[#allocation3 + $0x120] sm:$0xff] %v809
    %848 = vst [vmem:[#allocation3 + $0x128] sm:$0xff] %v810
    %v849 = vlaneseq
    %v850 = vand.u32 %v849, 127
    %851 = vset.pattern.permute.xlu0 0
    %852 = vperm.xlu0 %851, %v63
    %v853 = vpop.permute.xlu0 %852
    %854 = vset.pattern.permute.xlu0 0
    %855 = vperm.xlu0 %854, %v64
    %v856 = vpop.permute.xlu0 %855
    %857 = vset.pattern.permute.xlu0 0
    %858 = vperm.xlu0 %857, %v65
    %v859 = vpop.permute.xlu0 %858
    %860 = vset.pattern.permute.xlu0 0
    %861 = vperm.xlu0 %860, %v66
    %v862 = vpop.permute.xlu0 %861
    %863 = vset.pattern.permute.xlu0 0
    %864 = vperm.xlu0 %863, %v67
    %v865 = vpop.permute.xlu0 %864
    %866 = vset.pattern.permute.xlu0 0
    %867 = vperm.xlu0 %866, %v68
    %v868 = vpop.permute.xlu0 %867
    %869 = vset.pattern.permute.xlu0 0
    %870 = vperm.xlu0 %869, %v69
    %v871 = vpop.permute.xlu0 %870
    %872 = vset.pattern.permute.xlu0 0
    %873 = vperm.xlu0 %872, %v70
    %v874 = vpop.permute.xlu0 %873
    %875 = vset.pattern.permute.xlu0 0
    %876 = vperm.xlu0 %875, %v71
    %v877 = vpop.permute.xlu0 %876
    %878 = vset.pattern.permute.xlu0 0
    %879 = vperm.xlu0 %878, %v72
    %v880 = vpop.permute.xlu0 %879
    %881 = vset.pattern.permute.xlu0 0
    %882 = vperm.xlu0 %881, %v73
    %v883 = vpop.permute.xlu0 %882
    %884 = vset.pattern.permute.xlu0 0
    %885 = vperm.xlu0 %884, %v74
    %v886 = vpop.permute.xlu0 %885
    %887 = vset.pattern.permute.xlu0 0
    %888 = vperm.xlu0 %887, %v75
    %v889 = vpop.permute.xlu0 %888
    %890 = vset.pattern.permute.xlu0 0
    %891 = vperm.xlu0 %890, %v76
    %v892 = vpop.permute.xlu0 %891
    %893 = vset.pattern.permute.xlu0 0
    %894 = vperm.xlu0 %893, %v77
    %v895 = vpop.permute.xlu0 %894
    %896 = vset.pattern.permute.xlu0 0
    %897 = vperm.xlu0 %896, %v78
    %v898 = vpop.permute.xlu0 %897
    %899 = vset.pattern.permute.xlu0 0
    %900 = vperm.xlu0 %899, %v79
    %v901 = vpop.permute.xlu0 %900
    %902 = vset.pattern.permute.xlu0 0
    %903 = vperm.xlu0 %902, %v80
    %v904 = vpop.permute.xlu0 %903
    %905 = vset.pattern.permute.xlu0 0
    %906 = vperm.xlu0 %905, %v81
    %v907 = vpop.permute.xlu0 %906
    %908 = vset.pattern.permute.xlu0 0
    %909 = vperm.xlu0 %908, %v82
    %v910 = vpop.permute.xlu0 %909
    %911 = vset.pattern.permute.xlu0 0
    %912 = vperm.xlu0 %911, %v83
    %v913 = vpop.permute.xlu0 %912
    %914 = vset.pattern.permute.xlu0 0
    %915 = vperm.xlu0 %914, %v84
    %v916 = vpop.permute.xlu0 %915
    %917 = vset.pattern.permute.xlu0 0
    %918 = vperm.xlu0 %917, %v85
    %v919 = vpop.permute.xlu0 %918
    %920 = vset.pattern.permute.xlu0 0
    %921 = vperm.xlu0 %920, %v86
    %v922 = vpop.permute.xlu0 %921
    %923 = vset.pattern.permute.xlu0 0
    %924 = vperm.xlu0 %923, %v87
    %v925 = vpop.permute.xlu0 %924
    %926 = vset.pattern.permute.xlu0 0
    %927 = vperm.xlu0 %926, %v88
    %v928 = vpop.permute.xlu0 %927
    %929 = vset.pattern.permute.xlu0 0
    %930 = vperm.xlu0 %929, %v89
    %v931 = vpop.permute.xlu0 %930
    %932 = vset.pattern.permute.xlu0 0
    %933 = vperm.xlu0 %932, %v90
    %v934 = vpop.permute.xlu0 %933
    %935 = vset.pattern.permute.xlu0 0
    %936 = vperm.xlu0 %935, %v91
    %v937 = vpop.permute.xlu0 %936
    %938 = vset.pattern.permute.xlu0 0
    %939 = vperm.xlu0 %938, %v92
    %v940 = vpop.permute.xlu0 %939
    %941 = vset.pattern.permute.xlu0 0
    %942 = vperm.xlu0 %941, %v93
    %v943 = vpop.permute.xlu0 %942
    %944 = vset.pattern.permute.xlu0 0
    %945 = vperm.xlu0 %944, %v94
    %v946 = vpop.permute.xlu0 %945
    %947 = vset.pattern.permute.xlu0 0
    %948 = vperm.xlu0 %947, %v95
    %v949 = vpop.permute.xlu0 %948
    %950 = vset.pattern.permute.xlu0 0
    %951 = vperm.xlu0 %950, %v96
    %v952 = vpop.permute.xlu0 %951
    %953 = vset.pattern.permute.xlu0 0
    %954 = vperm.xlu0 %953, %v97
    %v955 = vpop.permute.xlu0 %954
    %956 = vset.pattern.permute.xlu0 0
    %957 = vperm.xlu0 %956, %v98
    %v958 = vpop.permute.xlu0 %957
    %959 = vset.pattern.permute.xlu0 0
    %960 = vperm.xlu0 %959, %v99
    %v961 = vpop.permute.xlu0 %960
    %962 = vset.pattern.permute.xlu0 0
    %963 = vperm.xlu0 %962, %v100
    %v964 = vpop.permute.xlu0 %963
    %vm965 = vcmp.eq.s32.totalorder %v850, %v853
    %vm966 = vcmp.eq.s32.totalorder %v850, %v856
    %vm967 = vcmp.eq.s32.totalorder %v850, %v859
    %vm968 = vcmp.eq.s32.totalorder %v850, %v862
    %vm969 = vcmp.eq.s32.totalorder %v850, %v865
    %vm970 = vcmp.eq.s32.totalorder %v850, %v868
    %vm971 = vcmp.eq.s32.totalorder %v850, %v871
    %vm972 = vcmp.eq.s32.totalorder %v850, %v874
    %vm973 = vcmp.eq.s32.totalorder %v850, %v877
    %vm974 = vcmp.eq.s32.totalorder %v850, %v880
    %vm975 = vcmp.eq.s32.totalorder %v850, %v883
    %vm976 = vcmp.eq.s32.totalorder %v850, %v886
    %vm977 = vcmp.eq.s32.totalorder %v850, %v889
    %vm978 = vcmp.eq.s32.totalorder %v850, %v892
    %vm979 = vcmp.eq.s32.totalorder %v850, %v895
    %vm980 = vcmp.eq.s32.totalorder %v850, %v898
    %vm981 = vcmp.eq.s32.totalorder %v850, %v901
    %vm982 = vcmp.eq.s32.totalorder %v850, %v904
    %vm983 = vcmp.eq.s32.totalorder %v850, %v907
    %vm984 = vcmp.eq.s32.totalorder %v850, %v910
    %vm985 = vcmp.eq.s32.totalorder %v850, %v913
    %vm986 = vcmp.eq.s32.totalorder %v850, %v916
    %vm987 = vcmp.eq.s32.totalorder %v850, %v919
    %vm988 = vcmp.eq.s32.totalorder %v850, %v922
    %vm989 = vcmp.eq.s32.totalorder %v850, %v925
    %vm990 = vcmp.eq.s32.totalorder %v850, %v928
    %vm991 = vcmp.eq.s32.totalorder %v850, %v931
    %vm992 = vcmp.eq.s32.totalorder %v850, %v934
    %vm993 = vcmp.eq.s32.totalorder %v850, %v937
    %vm994 = vcmp.eq.s32.totalorder %v850, %v940
    %vm995 = vcmp.eq.s32.totalorder %v850, %v943
    %vm996 = vcmp.eq.s32.totalorder %v850, %v946
    %vm997 = vcmp.eq.s32.totalorder %v850, %v949
    %vm998 = vcmp.eq.s32.totalorder %v850, %v952
    %vm999 = vcmp.eq.s32.totalorder %v850, %v955
    %vm1000 = vcmp.eq.s32.totalorder %v850, %v958
    %vm1001 = vcmp.eq.s32.totalorder %v850, %v961
    %vm1002 = vcmp.eq.s32.totalorder %v850, %v964
    %v1003 = vsel %vm965, 1, 0
    %v1004 = vsel %vm966, 1, 0
    %v1005 = vsel %vm967, 1, 0
    %v1006 = vsel %vm968, 1, 0
    %v1007 = vsel %vm969, 1, 0
    %v1008 = vsel %vm970, 1, 0
    %v1009 = vsel %vm971, 1, 0
    %v1010 = vsel %vm972, 1, 0
    %v1011 = vsel %vm973, 1, 0
    %v1012 = vsel %vm974, 1, 0
    %v1013 = vsel %vm975, 1, 0
    %v1014 = vsel %vm976, 1, 0
    %v1015 = vsel %vm977, 1, 0
    %v1016 = vsel %vm978, 1, 0
    %v1017 = vsel %vm979, 1, 0
    %v1018 = vsel %vm980, 1, 0
    %v1019 = vsel %vm981, 1, 0
    %v1020 = vsel %vm982, 1, 0
    %v1021 = vsel %vm983, 1, 0
    %v1022 = vsel %vm984, 1, 0
    %v1023 = vsel %vm985, 1, 0
    %v1024 = vsel %vm986, 1, 0
    %v1025 = vsel %vm987, 1, 0
    %v1026 = vsel %vm988, 1, 0
    %v1027 = vsel %vm989, 1, 0
    %v1028 = vsel %vm990, 1, 0
    %v1029 = vsel %vm991, 1, 0
    %v1030 = vsel %vm992, 1, 0
    %v1031 = vsel %vm993, 1, 0
    %v1032 = vsel %vm994, 1, 0
    %v1033 = vsel %vm995, 1, 0
    %v1034 = vsel %vm996, 1, 0
    %v1035 = vsel %vm997, 1, 0
    %v1036 = vsel %vm998, 1, 0
    %v1037 = vsel %vm999, 1, 0
    %v1038 = vsel %vm1000, 1, 0
    %v1039 = vsel %vm1001, 1, 0
    %v1040 = vsel %vm1002, 1, 0
    %v1041 = vcvt.s32.f32 %v1003
    %v1042 = vcvt.s32.f32 %v1004
    %v1043 = vcvt.s32.f32 %v1005
    %v1044 = vcvt.s32.f32 %v1006
    %v1045 = vcvt.s32.f32 %v1007
    %v1046 = vcvt.s32.f32 %v1008
    %v1047 = vcvt.s32.f32 %v1009
    %v1048 = vcvt.s32.f32 %v1010
    %v1049 = vcvt.s32.f32 %v1011
    %v1050 = vcvt.s32.f32 %v1012
    %v1051 = vcvt.s32.f32 %v1013
    %v1052 = vcvt.s32.f32 %v1014
    %v1053 = vcvt.s32.f32 %v1015
    %v1054 = vcvt.s32.f32 %v1016
    %v1055 = vcvt.s32.f32 %v1017
    %v1056 = vcvt.s32.f32 %v1018
    %v1057 = vcvt.s32.f32 %v1019
    %v1058 = vcvt.s32.f32 %v1020
    %v1059 = vcvt.s32.f32 %v1021
    %v1060 = vcvt.s32.f32 %v1022
    %v1061 = vcvt.s32.f32 %v1023
    %v1062 = vcvt.s32.f32 %v1024
    %v1063 = vcvt.s32.f32 %v1025
    %v1064 = vcvt.s32.f32 %v1026
    %v1065 = vcvt.s32.f32 %v1027
    %v1066 = vcvt.s32.f32 %v1028
    %v1067 = vcvt.s32.f32 %v1029
    %v1068 = vcvt.s32.f32 %v1030
    %v1069 = vcvt.s32.f32 %v1031
    %v1070 = vcvt.s32.f32 %v1032
    %v1071 = vcvt.s32.f32 %v1033
    %v1072 = vcvt.s32.f32 %v1034
    %v1073 = vcvt.s32.f32 %v1035
    %v1074 = vcvt.s32.f32 %v1036
    %v1075 = vcvt.s32.f32 %v1037
    %v1076 = vcvt.s32.f32 %v1038
    %v1077 = vcvt.s32.f32 %v1039
    %v1078 = vcvt.s32.f32 %v1040
    %vm1079 = vcmp.ge.s32.totalorder %v63, 0
    %vm1080 = vcmp.ge.s32.totalorder %v64, 0
    %vm1081 = vcmp.ge.s32.totalorder %v65, 0
    %vm1082 = vcmp.ge.s32.totalorder %v66, 0
    %vm1083 = vcmp.ge.s32.totalorder %v67, 0
    %vm1084 = vcmp.ge.s32.totalorder %v68, 0
    %vm1085 = vcmp.ge.s32.totalorder %v69, 0
    %vm1086 = vcmp.ge.s32.totalorder %v70, 0
    %vm1087 = vcmp.ge.s32.totalorder %v71, 0
    %vm1088 = vcmp.ge.s32.totalorder %v72, 0
    %vm1089 = vcmp.ge.s32.totalorder %v73, 0
    %vm1090 = vcmp.ge.s32.totalorder %v74, 0
    %vm1091 = vcmp.ge.s32.totalorder %v75, 0
    %vm1092 = vcmp.ge.s32.totalorder %v76, 0
    %vm1093 = vcmp.ge.s32.totalorder %v77, 0
    %vm1094 = vcmp.ge.s32.totalorder %v78, 0
    %vm1095 = vcmp.ge.s32.totalorder %v79, 0
    %vm1096 = vcmp.ge.s32.totalorder %v80, 0
    %vm1097 = vcmp.ge.s32.totalorder %v81, 0
    %vm1098 = vcmp.ge.s32.totalorder %v82, 0
    %vm1099 = vcmp.ge.s32.totalorder %v83, 0
    %vm1100 = vcmp.ge.s32.totalorder %v84, 0
    %vm1101 = vcmp.ge.s32.totalorder %v85, 0
    %vm1102 = vcmp.ge.s32.totalorder %v86, 0
    %vm1103 = vcmp.ge.s32.totalorder %v87, 0
    %vm1104 = vcmp.ge.s32.totalorder %v88, 0
    %vm1105 = vcmp.ge.s32.totalorder %v89, 0
    %vm1106 = vcmp.ge.s32.totalorder %v90, 0
    %vm1107 = vcmp.ge.s32.totalorder %v91, 0
    %vm1108 = vcmp.ge.s32.totalorder %v92, 0
    %vm1109 = vcmp.ge.s32.totalorder %v93, 0
    %vm1110 = vcmp.ge.s32.totalorder %v94, 0
    %vm1111 = vcmp.ge.s32.totalorder %v95, 0
    %vm1112 = vcmp.ge.s32.totalorder %v96, 0
    %vm1113 = vcmp.ge.s32.totalorder %v97, 0
    %vm1114 = vcmp.ge.s32.totalorder %v98, 0
    %vm1115 = vcmp.ge.s32.totalorder %v99, 0
    %vm1116 = vcmp.ge.s32.totalorder %v100, 0
    %v1117 = vsel %vm1079, 1, 0
    %v1118 = vsel %vm1080, 1, 0
    %v1119 = vsel %vm1081, 1, 0
    %v1120 = vsel %vm1082, 1, 0
    %v1121 = vsel %vm1083, 1, 0
    %v1122 = vsel %vm1084, 1, 0
    %v1123 = vsel %vm1085, 1, 0
    %v1124 = vsel %vm1086, 1, 0
    %v1125 = vsel %vm1087, 1, 0
    %v1126 = vsel %vm1088, 1, 0
    %v1127 = vsel %vm1089, 1, 0
    %v1128 = vsel %vm1090, 1, 0
    %v1129 = vsel %vm1091, 1, 0
    %v1130 = vsel %vm1092, 1, 0
    %v1131 = vsel %vm1093, 1, 0
    %v1132 = vsel %vm1094, 1, 0
    %v1133 = vsel %vm1095, 1, 0
    %v1134 = vsel %vm1096, 1, 0
    %v1135 = vsel %vm1097, 1, 0
    %v1136 = vsel %vm1098, 1, 0
    %v1137 = vsel %vm1099, 1, 0
    %v1138 = vsel %vm1100, 1, 0
    %v1139 = vsel %vm1101, 1, 0
    %v1140 = vsel %vm1102, 1, 0
    %v1141 = vsel %vm1103, 1, 0
    %v1142 = vsel %vm1104, 1, 0
    %v1143 = vsel %vm1105, 1, 0
    %v1144 = vsel %vm1106, 1, 0
    %v1145 = vsel %vm1107, 1, 0
    %v1146 = vsel %vm1108, 1, 0
    %v1147 = vsel %vm1109, 1, 0
    %v1148 = vsel %vm1110, 1, 0
    %v1149 = vsel %vm1111, 1, 0
    %v1150 = vsel %vm1112, 1, 0
    %v1151 = vsel %vm1113, 1, 0
    %v1152 = vsel %vm1114, 1, 0
    %v1153 = vsel %vm1115, 1, 0
    %v1154 = vsel %vm1116, 1, 0
    %v1155 = vcvt.s32.f32 %v1117
    %v1156 = vcvt.s32.f32 %v1118
    %v1157 = vcvt.s32.f32 %v1119
    %v1158 = vcvt.s32.f32 %v1120
    %v1159 = vcvt.s32.f32 %v1121
    %v1160 = vcvt.s32.f32 %v1122
    %v1161 = vcvt.s32.f32 %v1123
    %v1162 = vcvt.s32.f32 %v1124
    %v1163 = vcvt.s32.f32 %v1125
    %v1164 = vcvt.s32.f32 %v1126
    %v1165 = vcvt.s32.f32 %v1127
    %v1166 = vcvt.s32.f32 %v1128
    %v1167 = vcvt.s32.f32 %v1129
    %v1168 = vcvt.s32.f32 %v1130
    %v1169 = vcvt.s32.f32 %v1131
    %v1170 = vcvt.s32.f32 %v1132
    %v1171 = vcvt.s32.f32 %v1133
    %v1172 = vcvt.s32.f32 %v1134
    %v1173 = vcvt.s32.f32 %v1135
    %v1174 = vcvt.s32.f32 %v1136
    %v1175 = vcvt.s32.f32 %v1137
    %v1176 = vcvt.s32.f32 %v1138
    %v1177 = vcvt.s32.f32 %v1139
    %v1178 = vcvt.s32.f32 %v1140
    %v1179 = vcvt.s32.f32 %v1141
    %v1180 = vcvt.s32.f32 %v1142
    %v1181 = vcvt.s32.f32 %v1143
    %v1182 = vcvt.s32.f32 %v1144
    %v1183 = vcvt.s32.f32 %v1145
    %v1184 = vcvt.s32.f32 %v1146
    %v1185 = vcvt.s32.f32 %v1147
    %v1186 = vcvt.s32.f32 %v1148
    %v1187 = vcvt.s32.f32 %v1149
    %v1188 = vcvt.s32.f32 %v1150
    %v1189 = vcvt.s32.f32 %v1151
    %v1190 = vcvt.s32.f32 %v1152
    %v1191 = vcvt.s32.f32 %v1153
    %v1192 = vcvt.s32.f32 %v1154
    %vm1193 = vcmp.eq.f32.partialorder %v242, %v356
    %vm1194 = vcmp.eq.f32.partialorder %v245, %v358
    %vm1195 = vcmp.eq.f32.partialorder %v248, %v360
    %vm1196 = vcmp.eq.f32.partialorder %v251, %v362
    %vm1197 = vcmp.eq.f32.partialorder %v254, %v364
    %vm1198 = vcmp.eq.f32.partialorder %v257, %v366
    %vm1199 = vcmp.eq.f32.partialorder %v260, %v368
    %vm1200 = vcmp.eq.f32.partialorder %v263, %v370
    %vm1201 = vcmp.eq.f32.partialorder %v266, %v372
    %vm1202 = vcmp.eq.f32.partialorder %v269, %v374
    %vm1203 = vcmp.eq.f32.partialorder %v272, %v376
    %vm1204 = vcmp.eq.f32.partialorder %v275, %v378
    %vm1205 = vcmp.eq.f32.partialorder %v278, %v380
    %vm1206 = vcmp.eq.f32.partialorder %v281, %v382
    %vm1207 = vcmp.eq.f32.partialorder %v284, %v384
    %vm1208 = vcmp.eq.f32.partialorder %v287, %v386
    %vm1209 = vcmp.eq.f32.partialorder %v290, %v388
    %vm1210 = vcmp.eq.f32.partialorder %v293, %v390
    %vm1211 = vcmp.eq.f32.partialorder %v296, %v392
    %vm1212 = vcmp.eq.f32.partialorder %v299, %v394
    %vm1213 = vcmp.eq.f32.partialorder %v302, %v396
    %vm1214 = vcmp.eq.f32.partialorder %v305, %v398
    %vm1215 = vcmp.eq.f32.partialorder %v308, %v400
    %vm1216 = vcmp.eq.f32.partialorder %v311, %v402
    %vm1217 = vcmp.eq.f32.partialorder %v314, %v404
    %vm1218 = vcmp.eq.f32.partialorder %v317, %v406
    %vm1219 = vcmp.eq.f32.partialorder %v320, %v408
    %vm1220 = vcmp.eq.f32.partialorder %v323, %v410
    %vm1221 = vcmp.eq.f32.partialorder %v326, %v412
    %vm1222 = vcmp.eq.f32.partialorder %v329, %v414
    %vm1223 = vcmp.eq.f32.partialorder %v332, %v416
    %vm1224 = vcmp.eq.f32.partialorder %v335, %v418
    %vm1225 = vcmp.eq.f32.partialorder %v338, %v420
    %vm1226 = vcmp.eq.f32.partialorder %v341, %v422
    %vm1227 = vcmp.eq.f32.partialorder %v344, %v424
    %vm1228 = vcmp.eq.f32.partialorder %v347, %v426
    %vm1229 = vcmp.eq.f32.partialorder %v350, %v428
    %vm1230 = vcmp.eq.f32.partialorder %v353, %v430
    %v1231 = vsel %vm1193, %v850, 128
    %v1232 = vsel %vm1194, %v850, 128
    %v1233 = vsel %vm1195, %v850, 128
    %v1234 = vsel %vm1196, %v850, 128
    %v1235 = vsel %vm1197, %v850, 128
    %v1236 = vsel %vm1198, %v850, 128
    %v1237 = vsel %vm1199, %v850, 128
    %v1238 = vsel %vm1200, %v850, 128
    %v1239 = vsel %vm1201, %v850, 128
    %v1240 = vsel %vm1202, %v850, 128
    %v1241 = vsel %vm1203, %v850, 128
    %v1242 = vsel %vm1204, %v850, 128
    %v1243 = vsel %vm1205, %v850, 128
    %v1244 = vsel %vm1206, %v850, 128
    %v1245 = vsel %vm1207, %v850, 128
    %v1246 = vsel %vm1208, %v850, 128
    %v1247 = vsel %vm1209, %v850, 128
    %v1248 = vsel %vm1210, %v850, 128
    %v1249 = vsel %vm1211, %v850, 128
    %v1250 = vsel %vm1212, %v850, 128
    %v1251 = vsel %vm1213, %v850, 128
    %v1252 = vsel %vm1214, %v850, 128
    %v1253 = vsel %vm1215, %v850, 128
    %v1254 = vsel %vm1216, %v850, 128
    %v1255 = vsel %vm1217, %v850, 128
    %v1256 = vsel %vm1218, %v850, 128
    %v1257 = vsel %vm1219, %v850, 128
    %v1258 = vsel %vm1220, %v850, 128
    %v1259 = vsel %vm1221, %v850, 128
    %v1260 = vsel %vm1222, %v850, 128
    %v1261 = vsel %vm1223, %v850, 128
    %v1262 = vsel %vm1224, %v850, 128
    %v1263 = vsel %vm1225, %v850, 128
    %v1264 = vsel %vm1226, %v850, 128
    %v1265 = vsel %vm1227, %v850, 128
    %v1266 = vsel %vm1228, %v850, 128
    %v1267 = vsel %vm1229, %v850, 128
    %v1268 = vsel %vm1230, %v850, 128
    %v1269 = vand.u32 %v1231, 65535
    %v1270 = vshra.s32 %v1231, 16
    %v1271 = vcvt.s32.f32 %v1269
    %v1272 = vcvt.s32.f32 %v1270
    %1273 = vmin.xlane.f32.xlu0 %v1272
    %v1274 = vpop.xlane.xlu0 %1273
    %vm1275 = vcmp.eq.f32.partialorder %v1272, %v1274
    %v1276 = vsel %vm1275, %v1271, inf
    %1277 = vmin.xlane.f32.xlu0 %v1276
    %v1278 = vpop.xlane.xlu0 %1277
    %v1279 = vcvt.f32.s32 %v1278
    %v1280 = vcvt.f32.s32 %v1274
    %v1281 = vshll.u32 %v1280, 16
    %v1282 = vadd.s32 %v1281, %v1279
    %v1283 = vand.u32 %v1232, 65535
    %v1284 = vshra.s32 %v1232, 16
    %v1285 = vcvt.s32.f32 %v1283
    %v1286 = vcvt.s32.f32 %v1284
    %1287 = vmin.xlane.f32.xlu0 %v1286
    %v1288 = vpop.xlane.xlu0 %1287
    %vm1289 = vcmp.eq.f32.partialorder %v1286, %v1288
    %v1290 = vsel %vm1289, %v1285, inf
    %1291 = vmin.xlane.f32.xlu0 %v1290
    %v1292 = vpop.xlane.xlu0 %1291
    %v1293 = vcvt.f32.s32 %v1292
    %v1294 = vcvt.f32.s32 %v1288
    %v1295 = vshll.u32 %v1294, 16
    %v1296 = vadd.s32 %v1295, %v1293
    %v1297 = vand.u32 %v1233, 65535
    %v1298 = vshra.s32 %v1233, 16
    %v1299 = vcvt.s32.f32 %v1297
    %v1300 = vcvt.s32.f32 %v1298
    %1301 = vmin.xlane.f32.xlu0 %v1300
    %v1302 = vpop.xlane.xlu0 %1301
    %vm1303 = vcmp.eq.f32.partialorder %v1300, %v1302
    %v1304 = vsel %vm1303, %v1299, inf
    %1305 = vmin.xlane.f32.xlu0 %v1304
    %v1306 = vpop.xlane.xlu0 %1305
    %v1307 = vcvt.f32.s32 %v1306
    %v1308 = vcvt.f32.s32 %v1302
    %v1309 = vshll.u32 %v1308, 16
    %v1310 = vadd.s32 %v1309, %v1307
    %v1311 = vand.u32 %v1234, 65535
    %v1312 = vshra.s32 %v1234, 16
    %v1313 = vcvt.s32.f32 %v1311
    %v1314 = vcvt.s32.f32 %v1312
    %1315 = vmin.xlane.f32.xlu0 %v1314
    %v1316 = vpop.xlane.xlu0 %1315
    %vm1317 = vcmp.eq.f32.partialorder %v1314, %v1316
    %v1318 = vsel %vm1317, %v1313, inf
    %1319 = vmin.xlane.f32.xlu0 %v1318
    %v1320 = vpop.xlane.xlu0 %1319
    %v1321 = vcvt.f32.s32 %v1320
    %v1322 = vcvt.f32.s32 %v1316
    %v1323 = vshll.u32 %v1322, 16
    %v1324 = vadd.s32 %v1323, %v1321
    %v1325 = vand.u32 %v1235, 65535
    %v1326 = vshra.s32 %v1235, 16
    %v1327 = vcvt.s32.f32 %v1325
    %v1328 = vcvt.s32.f32 %v1326
    %1329 = vmin.xlane.f32.xlu0 %v1328
    %v1330 = vpop.xlane.xlu0 %1329
    %vm1331 = vcmp.eq.f32.partialorder %v1328, %v1330
    %v1332 = vsel %vm1331, %v1327, inf
    %1333 = vmin.xlane.f32.xlu0 %v1332
    %v1334 = vpop.xlane.xlu0 %1333
    %v1335 = vcvt.f32.s32 %v1334
    %v1336 = vcvt.f32.s32 %v1330
    %v1337 = vshll.u32 %v1336, 16
    %v1338 = vadd.s32 %v1337, %v1335
    %v1339 = vand.u32 %v1236, 65535
    %v1340 = vshra.s32 %v1236, 16
    %v1341 = vcvt.s32.f32 %v1339
    %v1342 = vcvt.s32.f32 %v1340
    %1343 = vmin.xlane.f32.xlu0 %v1342
    %v1344 = vpop.xlane.xlu0 %1343
    %vm1345 = vcmp.eq.f32.partialorder %v1342, %v1344
    %v1346 = vsel %vm1345, %v1341, inf
    %1347 = vmin.xlane.f32.xlu0 %v1346
    %v1348 = vpop.xlane.xlu0 %1347
    %v1349 = vcvt.f32.s32 %v1348
    %v1350 = vcvt.f32.s32 %v1344
    %v1351 = vshll.u32 %v1350, 16
    %v1352 = vadd.s32 %v1351, %v1349
    %v1353 = vand.u32 %v1237, 65535
    %v1354 = vshra.s32 %v1237, 16
    %v1355 = vcvt.s32.f32 %v1353
    %v1356 = vcvt.s32.f32 %v1354
    %1357 = vmin.xlane.f32.xlu0 %v1356
    %v1358 = vpop.xlane.xlu0 %1357
    %vm1359 = vcmp.eq.f32.partialorder %v1356, %v1358
    %v1360 = vsel %vm1359, %v1355, inf
    %1361 = vmin.xlane.f32.xlu0 %v1360
    %v1362 = vpop.xlane.xlu0 %1361
    %v1363 = vcvt.f32.s32 %v1362
    %v1364 = vcvt.f32.s32 %v1358
    %v1365 = vshll.u32 %v1364, 16
    %v1366 = vadd.s32 %v1365, %v1363
    %v1367 = vand.u32 %v1238, 65535
    %v1368 = vshra.s32 %v1238, 16
    %v1369 = vcvt.s32.f32 %v1367
    %v1370 = vcvt.s32.f32 %v1368
    %1371 = vmin.xlane.f32.xlu0 %v1370
    %v1372 = vpop.xlane.xlu0 %1371
    %vm1373 = vcmp.eq.f32.partialorder %v1370, %v1372
    %v1374 = vsel %vm1373, %v1369, inf
    %1375 = vmin.xlane.f32.xlu0 %v1374
    %v1376 = vpop.xlane.xlu0 %1375
    %v1377 = vcvt.f32.s32 %v1376
    %v1378 = vcvt.f32.s32 %v1372
    %v1379 = vshll.u32 %v1378, 16
    %v1380 = vadd.s32 %v1379, %v1377
    %v1381 = vand.u32 %v1239, 65535
    %v1382 = vshra.s32 %v1239, 16
    %v1383 = vcvt.s32.f32 %v1381
    %v1384 = vcvt.s32.f32 %v1382
    %1385 = vmin.xlane.f32.xlu0 %v1384
    %v1386 = vpop.xlane.xlu0 %1385
    %vm1387 = vcmp.eq.f32.partialorder %v1384, %v1386
    %v1388 = vsel %vm1387, %v1383, inf
    %1389 = vmin.xlane.f32.xlu0 %v1388
    %v1390 = vpop.xlane.xlu0 %1389
    %v1391 = vcvt.f32.s32 %v1390
    %v1392 = vcvt.f32.s32 %v1386
    %v1393 = vshll.u32 %v1392, 16
    %v1394 = vadd.s32 %v1393, %v1391
    %v1395 = vand.u32 %v1240, 65535
    %v1396 = vshra.s32 %v1240, 16
    %v1397 = vcvt.s32.f32 %v1395
    %v1398 = vcvt.s32.f32 %v1396
    %1399 = vmin.xlane.f32.xlu0 %v1398
    %v1400 = vpop.xlane.xlu0 %1399
    %vm1401 = vcmp.eq.f32.partialorder %v1398, %v1400
    %v1402 = vsel %vm1401, %v1397, inf
    %1403 = vmin.xlane.f32.xlu0 %v1402
    %v1404 = vpop.xlane.xlu0 %1403
    %v1405 = vcvt.f32.s32 %v1404
    %v1406 = vcvt.f32.s32 %v1400
    %v1407 = vshll.u32 %v1406, 16
    %v1408 = vadd.s32 %v1407, %v1405
    %v1409 = vand.u32 %v1241, 65535
    %v1410 = vshra.s32 %v1241, 16
    %v1411 = vcvt.s32.f32 %v1409
    %v1412 = vcvt.s32.f32 %v1410
    %1413 = vmin.xlane.f32.xlu0 %v1412
    %v1414 = vpop.xlane.xlu0 %1413
    %vm1415 = vcmp.eq.f32.partialorder %v1412, %v1414
    %v1416 = vsel %vm1415, %v1411, inf
    %1417 = vmin.xlane.f32.xlu0 %v1416
    %v1418 = vpop.xlane.xlu0 %1417
    %v1419 = vcvt.f32.s32 %v1418
    %v1420 = vcvt.f32.s32 %v1414
    %v1421 = vshll.u32 %v1420, 16
    %v1422 = vadd.s32 %v1421, %v1419
    %v1423 = vand.u32 %v1242, 65535
    %v1424 = vshra.s32 %v1242, 16
    %v1425 = vcvt.s32.f32 %v1423
    %v1426 = vcvt.s32.f32 %v1424
    %1427 = vmin.xlane.f32.xlu0 %v1426
    %v1428 = vpop.xlane.xlu0 %1427
    %vm1429 = vcmp.eq.f32.partialorder %v1426, %v1428
    %v1430 = vsel %vm1429, %v1425, inf
    %1431 = vmin.xlane.f32.xlu0 %v1430
    %v1432 = vpop.xlane.xlu0 %1431
    %v1433 = vcvt.f32.s32 %v1432
    %v1434 = vcvt.f32.s32 %v1428
    %v1435 = vshll.u32 %v1434, 16
    %v1436 = vadd.s32 %v1435, %v1433
    %v1437 = vand.u32 %v1243, 65535
    %v1438 = vshra.s32 %v1243, 16
    %v1439 = vcvt.s32.f32 %v1437
    %v1440 = vcvt.s32.f32 %v1438
    %1441 = vmin.xlane.f32.xlu0 %v1440
    %v1442 = vpop.xlane.xlu0 %1441
    %vm1443 = vcmp.eq.f32.partialorder %v1440, %v1442
    %v1444 = vsel %vm1443, %v1439, inf
    %1445 = vmin.xlane.f32.xlu0 %v1444
    %v1446 = vpop.xlane.xlu0 %1445
    %v1447 = vcvt.f32.s32 %v1446
    %v1448 = vcvt.f32.s32 %v1442
    %v1449 = vshll.u32 %v1448, 16
    %v1450 = vadd.s32 %v1449, %v1447
    %v1451 = vand.u32 %v1244, 65535
    %v1452 = vshra.s32 %v1244, 16
    %v1453 = vcvt.s32.f32 %v1451
    %v1454 = vcvt.s32.f32 %v1452
    %1455 = vmin.xlane.f32.xlu0 %v1454
    %v1456 = vpop.xlane.xlu0 %1455
    %vm1457 = vcmp.eq.f32.partialorder %v1454, %v1456
    %v1458 = vsel %vm1457, %v1453, inf
    %1459 = vmin.xlane.f32.xlu0 %v1458
    %v1460 = vpop.xlane.xlu0 %1459
    %v1461 = vcvt.f32.s32 %v1460
    %v1462 = vcvt.f32.s32 %v1456
    %v1463 = vshll.u32 %v1462, 16
    %v1464 = vadd.s32 %v1463, %v1461
    %v1465 = vand.u32 %v1245, 65535
    %v1466 = vshra.s32 %v1245, 16
    %v1467 = vcvt.s32.f32 %v1465
    %v1468 = vcvt.s32.f32 %v1466
    %1469 = vmin.xlane.f32.xlu0 %v1468
    %v1470 = vpop.xlane.xlu0 %1469
    %vm1471 = vcmp.eq.f32.partialorder %v1468, %v1470
    %v1472 = vsel %vm1471, %v1467, inf
    %1473 = vmin.xlane.f32.xlu0 %v1472
    %v1474 = vpop.xlane.xlu0 %1473
    %v1475 = vcvt.f32.s32 %v1474
    %v1476 = vcvt.f32.s32 %v1470
    %v1477 = vshll.u32 %v1476, 16
    %v1478 = vadd.s32 %v1477, %v1475
    %v1479 = vand.u32 %v1246, 65535
    %v1480 = vshra.s32 %v1246, 16
    %v1481 = vcvt.s32.f32 %v1479
    %v1482 = vcvt.s32.f32 %v1480
    %1483 = vmin.xlane.f32.xlu0 %v1482
    %v1484 = vpop.xlane.xlu0 %1483
    %vm1485 = vcmp.eq.f32.partialorder %v1482, %v1484
    %v1486 = vsel %vm1485, %v1481, inf
    %1487 = vmin.xlane.f32.xlu0 %v1486
    %v1488 = vpop.xlane.xlu0 %1487
    %v1489 = vcvt.f32.s32 %v1488
    %v1490 = vcvt.f32.s32 %v1484
    %v1491 = vshll.u32 %v1490, 16
    %v1492 = vadd.s32 %v1491, %v1489
    %v1493 = vand.u32 %v1247, 65535
    %v1494 = vshra.s32 %v1247, 16
    %v1495 = vcvt.s32.f32 %v1493
    %v1496 = vcvt.s32.f32 %v1494
    %1497 = vmin.xlane.f32.xlu0 %v1496
    %v1498 = vpop.xlane.xlu0 %1497
    %vm1499 = vcmp.eq.f32.partialorder %v1496, %v1498
    %v1500 = vsel %vm1499, %v1495, inf
    %1501 = vmin.xlane.f32.xlu0 %v1500
    %v1502 = vpop.xlane.xlu0 %1501
    %v1503 = vcvt.f32.s32 %v1502
    %v1504 = vcvt.f32.s32 %v1498
    %v1505 = vshll.u32 %v1504, 16
    %v1506 = vadd.s32 %v1505, %v1503
    %v1507 = vand.u32 %v1248, 65535
    %v1508 = vshra.s32 %v1248, 16
    %v1509 = vcvt.s32.f32 %v1507
    %v1510 = vcvt.s32.f32 %v1508
    %1511 = vmin.xlane.f32.xlu0 %v1510
    %v1512 = vpop.xlane.xlu0 %1511
    %vm1513 = vcmp.eq.f32.partialorder %v1510, %v1512
    %v1514 = vsel %vm1513, %v1509, inf
    %1515 = vmin.xlane.f32.xlu0 %v1514
    %v1516 = vpop.xlane.xlu0 %1515
    %v1517 = vcvt.f32.s32 %v1516
    %v1518 = vcvt.f32.s32 %v1512
    %v1519 = vshll.u32 %v1518, 16
    %v1520 = vadd.s32 %v1519, %v1517
    %v1521 = vand.u32 %v1249, 65535
    %v1522 = vshra.s32 %v1249, 16
    %v1523 = vcvt.s32.f32 %v1521
    %v1524 = vcvt.s32.f32 %v1522
    %1525 = vmin.xlane.f32.xlu0 %v1524
    %v1526 = vpop.xlane.xlu0 %1525
    %vm1527 = vcmp.eq.f32.partialorder %v1524, %v1526
    %v1528 = vsel %vm1527, %v1523, inf
    %1529 = vmin.xlane.f32.xlu0 %v1528
    %v1530 = vpop.xlane.xlu0 %1529
    %v1531 = vcvt.f32.s32 %v1530
    %v1532 = vcvt.f32.s32 %v1526
    %v1533 = vshll.u32 %v1532, 16
    %v1534 = vadd.s32 %v1533, %v1531
    %v1535 = vand.u32 %v1250, 65535
    %v1536 = vshra.s32 %v1250, 16
    %v1537 = vcvt.s32.f32 %v1535
    %v1538 = vcvt.s32.f32 %v1536
    %1539 = vmin.xlane.f32.xlu0 %v1538
    %v1540 = vpop.xlane.xlu0 %1539
    %vm1541 = vcmp.eq.f32.partialorder %v1538, %v1540
    %v1542 = vsel %vm1541, %v1537, inf
    %1543 = vmin.xlane.f32.xlu0 %v1542
    %v1544 = vpop.xlane.xlu0 %1543
    %v1545 = vcvt.f32.s32 %v1544
    %v1546 = vcvt.f32.s32 %v1540
    %v1547 = vshll.u32 %v1546, 16
    %v1548 = vadd.s32 %v1547, %v1545
    %v1549 = vand.u32 %v1251, 65535
    %v1550 = vshra.s32 %v1251, 16
    %v1551 = vcvt.s32.f32 %v1549
    %v1552 = vcvt.s32.f32 %v1550
    %1553 = vmin.xlane.f32.xlu0 %v1552
    %v1554 = vpop.xlane.xlu0 %1553
    %vm1555 = vcmp.eq.f32.partialorder %v1552, %v1554
    %v1556 = vsel %vm1555, %v1551, inf
    %1557 = vmin.xlane.f32.xlu0 %v1556
    %v1558 = vpop.xlane.xlu0 %1557
    %v1559 = vcvt.f32.s32 %v1558
    %v1560 = vcvt.f32.s32 %v1554
    %v1561 = vshll.u32 %v1560, 16
    %v1562 = vadd.s32 %v1561, %v1559
    %v1563 = vand.u32 %v1252, 65535
    %v1564 = vshra.s32 %v1252, 16
    %v1565 = vcvt.s32.f32 %v1563
    %v1566 = vcvt.s32.f32 %v1564
    %1567 = vmin.xlane.f32.xlu0 %v1566
    %v1568 = vpop.xlane.xlu0 %1567
    %vm1569 = vcmp.eq.f32.partialorder %v1566, %v1568
    %v1570 = vsel %vm1569, %v1565, inf
    %1571 = vmin.xlane.f32.xlu0 %v1570
    %v1572 = vpop.xlane.xlu0 %1571
    %v1573 = vcvt.f32.s32 %v1572
    %v1574 = vcvt.f32.s32 %v1568
    %v1575 = vshll.u32 %v1574, 16
    %v1576 = vadd.s32 %v1575, %v1573
    %v1577 = vand.u32 %v1253, 65535
    %v1578 = vshra.s32 %v1253, 16
    %v1579 = vcvt.s32.f32 %v1577
    %v1580 = vcvt.s32.f32 %v1578
    %1581 = vmin.xlane.f32.xlu0 %v1580
    %v1582 = vpop.xlane.xlu0 %1581
    %vm1583 = vcmp.eq.f32.partialorder %v1580, %v1582
    %v1584 = vsel %vm1583, %v1579, inf
    %1585 = vmin.xlane.f32.xlu0 %v1584
    %v1586 = vpop.xlane.xlu0 %1585
    %v1587 = vcvt.f32.s32 %v1586
    %v1588 = vcvt.f32.s32 %v1582
    %v1589 = vshll.u32 %v1588, 16
    %v1590 = vadd.s32 %v1589, %v1587
    %v1591 = vand.u32 %v1254, 65535
    %v1592 = vshra.s32 %v1254, 16
    %v1593 = vcvt.s32.f32 %v1591
    %v1594 = vcvt.s32.f32 %v1592
    %1595 = vmin.xlane.f32.xlu0 %v1594
    %v1596 = vpop.xlane.xlu0 %1595
    %vm1597 = vcmp.eq.f32.partialorder %v1594, %v1596
    %v1598 = vsel %vm1597, %v1593, inf
    %1599 = vmin.xlane.f32.xlu0 %v1598
    %v1600 = vpop.xlane.xlu0 %1599
    %v1601 = vcvt.f32.s32 %v1600
    %v1602 = vcvt.f32.s32 %v1596
    %v1603 = vshll.u32 %v1602, 16
    %v1604 = vadd.s32 %v1603, %v1601
    %v1605 = vand.u32 %v1255, 65535
    %v1606 = vshra.s32 %v1255, 16
    %v1607 = vcvt.s32.f32 %v1605
    %v1608 = vcvt.s32.f32 %v1606
    %1609 = vmin.xlane.f32.xlu0 %v1608
    %v1610 = vpop.xlane.xlu0 %1609
    %vm1611 = vcmp.eq.f32.partialorder %v1608, %v1610
    %v1612 = vsel %vm1611, %v1607, inf
    %1613 = vmin.xlane.f32.xlu0 %v1612
    %v1614 = vpop.xlane.xlu0 %1613
    %v1615 = vcvt.f32.s32 %v1614
    %v1616 = vcvt.f32.s32 %v1610
    %v1617 = vshll.u32 %v1616, 16
    %v1618 = vadd.s32 %v1617, %v1615
    %v1619 = vand.u32 %v1256, 65535
    %v1620 = vshra.s32 %v1256, 16
    %v1621 = vcvt.s32.f32 %v1619
    %v1622 = vcvt.s32.f32 %v1620
    %1623 = vmin.xlane.f32.xlu0 %v1622
    %v1624 = vpop.xlane.xlu0 %1623
    %vm1625 = vcmp.eq.f32.partialorder %v1622, %v1624
    %v1626 = vsel %vm1625, %v1621, inf
    %1627 = vmin.xlane.f32.xlu0 %v1626
    %v1628 = vpop.xlane.xlu0 %1627
    %v1629 = vcvt.f32.s32 %v1628
    %v1630 = vcvt.f32.s32 %v1624
    %v1631 = vshll.u32 %v1630, 16
    %v1632 = vadd.s32 %v1631, %v1629
    %v1633 = vand.u32 %v1257, 65535
    %v1634 = vshra.s32 %v1257, 16
    %v1635 = vcvt.s32.f32 %v1633
    %v1636 = vcvt.s32.f32 %v1634
    %1637 = vmin.xlane.f32.xlu0 %v1636
    %v1638 = vpop.xlane.xlu0 %1637
    %vm1639 = vcmp.eq.f32.partialorder %v1636, %v1638
    %v1640 = vsel %vm1639, %v1635, inf
    %1641 = vmin.xlane.f32.xlu0 %v1640
    %v1642 = vpop.xlane.xlu0 %1641
    %v1643 = vcvt.f32.s32 %v1642
    %v1644 = vcvt.f32.s32 %v1638
    %v1645 = vshll.u32 %v1644, 16
    %v1646 = vadd.s32 %v1645, %v1643
    %v1647 = vand.u32 %v1258, 65535
    %v1648 = vshra.s32 %v1258, 16
    %v1649 = vcvt.s32.f32 %v1647
    %v1650 = vcvt.s32.f32 %v1648
    %1651 = vmin.xlane.f32.xlu0 %v1650
    %v1652 = vpop.xlane.xlu0 %1651
    %vm1653 = vcmp.eq.f32.partialorder %v1650, %v1652
    %v1654 = vsel %vm1653, %v1649, inf
    %1655 = vmin.xlane.f32.xlu0 %v1654
    %v1656 = vpop.xlane.xlu0 %1655
    %v1657 = vcvt.f32.s32 %v1656
    %v1658 = vcvt.f32.s32 %v1652
    %v1659 = vshll.u32 %v1658, 16
    %v1660 = vadd.s32 %v1659, %v1657
    %v1661 = vand.u32 %v1259, 65535
    %v1662 = vshra.s32 %v1259, 16
    %v1663 = vcvt.s32.f32 %v1661
    %v1664 = vcvt.s32.f32 %v1662
    %1665 = vmin.xlane.f32.xlu0 %v1664
    %v1666 = vpop.xlane.xlu0 %1665
    %vm1667 = vcmp.eq.f32.partialorder %v1664, %v1666
    %v1668 = vsel %vm1667, %v1663, inf
    %1669 = vmin.xlane.f32.xlu0 %v1668
    %v1670 = vpop.xlane.xlu0 %1669
    %v1671 = vcvt.f32.s32 %v1670
    %v1672 = vcvt.f32.s32 %v1666
    %v1673 = vshll.u32 %v1672, 16
    %v1674 = vadd.s32 %v1673, %v1671
    %v1675 = vand.u32 %v1260, 65535
    %v1676 = vshra.s32 %v1260, 16
    %v1677 = vcvt.s32.f32 %v1675
    %v1678 = vcvt.s32.f32 %v1676
    %1679 = vmin.xlane.f32.xlu0 %v1678
    %v1680 = vpop.xlane.xlu0 %1679
    %vm1681 = vcmp.eq.f32.partialorder %v1678, %v1680
    %v1682 = vsel %vm1681, %v1677, inf
    %1683 = vmin.xlane.f32.xlu0 %v1682
    %v1684 = vpop.xlane.xlu0 %1683
    %v1685 = vcvt.f32.s32 %v1684
    %v1686 = vcvt.f32.s32 %v1680
    %v1687 = vshll.u32 %v1686, 16
    %v1688 = vadd.s32 %v1687, %v1685
    %v1689 = vand.u32 %v1261, 65535
    %v1690 = vshra.s32 %v1261, 16
    %v1691 = vcvt.s32.f32 %v1689
    %v1692 = vcvt.s32.f32 %v1690
    %1693 = vmin.xlane.f32.xlu0 %v1692
    %v1694 = vpop.xlane.xlu0 %1693
    %vm1695 = vcmp.eq.f32.partialorder %v1692, %v1694
    %v1696 = vsel %vm1695, %v1691, inf
    %1697 = vmin.xlane.f32.xlu0 %v1696
    %v1698 = vpop.xlane.xlu0 %1697
    %v1699 = vcvt.f32.s32 %v1698
    %v1700 = vcvt.f32.s32 %v1694
    %v1701 = vshll.u32 %v1700, 16
    %v1702 = vadd.s32 %v1701, %v1699
    %v1703 = vand.u32 %v1262, 65535
    %v1704 = vshra.s32 %v1262, 16
    %v1705 = vcvt.s32.f32 %v1703
    %v1706 = vcvt.s32.f32 %v1704
    %1707 = vmin.xlane.f32.xlu0 %v1706
    %v1708 = vpop.xlane.xlu0 %1707
    %vm1709 = vcmp.eq.f32.partialorder %v1706, %v1708
    %v1710 = vsel %vm1709, %v1705, inf
    %1711 = vmin.xlane.f32.xlu0 %v1710
    %v1712 = vpop.xlane.xlu0 %1711
    %v1713 = vcvt.f32.s32 %v1712
    %v1714 = vcvt.f32.s32 %v1708
    %v1715 = vshll.u32 %v1714, 16
    %v1716 = vadd.s32 %v1715, %v1713
    %v1717 = vand.u32 %v1263, 65535
    %v1718 = vshra.s32 %v1263, 16
    %v1719 = vcvt.s32.f32 %v1717
    %v1720 = vcvt.s32.f32 %v1718
    %1721 = vmin.xlane.f32.xlu0 %v1720
    %v1722 = vpop.xlane.xlu0 %1721
    %vm1723 = vcmp.eq.f32.partialorder %v1720, %v1722
    %v1724 = vsel %vm1723, %v1719, inf
    %1725 = vmin.xlane.f32.xlu0 %v1724
    %v1726 = vpop.xlane.xlu0 %1725
    %v1727 = vcvt.f32.s32 %v1726
    %v1728 = vcvt.f32.s32 %v1722
    %v1729 = vshll.u32 %v1728, 16
    %v1730 = vadd.s32 %v1729, %v1727
    %v1731 = vand.u32 %v1264, 65535
    %v1732 = vshra.s32 %v1264, 16
    %v1733 = vcvt.s32.f32 %v1731
    %v1734 = vcvt.s32.f32 %v1732
    %1735 = vmin.xlane.f32.xlu0 %v1734
    %v1736 = vpop.xlane.xlu0 %1735
    %vm1737 = vcmp.eq.f32.partialorder %v1734, %v1736
    %v1738 = vsel %vm1737, %v1733, inf
    %1739 = vmin.xlane.f32.xlu0 %v1738
    %v1740 = vpop.xlane.xlu0 %1739
    %v1741 = vcvt.f32.s32 %v1740
    %v1742 = vcvt.f32.s32 %v1736
    %v1743 = vshll.u32 %v1742, 16
    %v1744 = vadd.s32 %v1743, %v1741
    %v1745 = vand.u32 %v1265, 65535
    %v1746 = vshra.s32 %v1265, 16
    %v1747 = vcvt.s32.f32 %v1745
    %v1748 = vcvt.s32.f32 %v1746
    %1749 = vmin.xlane.f32.xlu0 %v1748
    %v1750 = vpop.xlane.xlu0 %1749
    %vm1751 = vcmp.eq.f32.partialorder %v1748, %v1750
    %v1752 = vsel %vm1751, %v1747, inf
    %1753 = vmin.xlane.f32.xlu0 %v1752
    %v1754 = vpop.xlane.xlu0 %1753
    %v1755 = vcvt.f32.s32 %v1754
    %v1756 = vcvt.f32.s32 %v1750
    %v1757 = vshll.u32 %v1756, 16
    %v1758 = vadd.s32 %v1757, %v1755
    %v1759 = vand.u32 %v1266, 65535
    %v1760 = vshra.s32 %v1266, 16
    %v1761 = vcvt.s32.f32 %v1759
    %v1762 = vcvt.s32.f32 %v1760
    %1763 = vmin.xlane.f32.xlu0 %v1762
    %v1764 = vpop.xlane.xlu0 %1763
    %vm1765 = vcmp.eq.f32.partialorder %v1762, %v1764
    %v1766 = vsel %vm1765, %v1761, inf
    %1767 = vmin.xlane.f32.xlu0 %v1766
    %v1768 = vpop.xlane.xlu0 %1767
    %v1769 = vcvt.f32.s32 %v1768
    %v1770 = vcvt.f32.s32 %v1764
    %v1771 = vshll.u32 %v1770, 16
    %v1772 = vadd.s32 %v1771, %v1769
    %v1773 = vand.u32 %v1267, 65535
    %v1774 = vshra.s32 %v1267, 16
    %v1775 = vcvt.s32.f32 %v1773
    %v1776 = vcvt.s32.f32 %v1774
    %1777 = vmin.xlane.f32.xlu0 %v1776
    %v1778 = vpop.xlane.xlu0 %1777
    %vm1779 = vcmp.eq.f32.partialorder %v1776, %v1778
    %v1780 = vsel %vm1779, %v1775, inf
    %1781 = vmin.xlane.f32.xlu0 %v1780
    %v1782 = vpop.xlane.xlu0 %1781
    %v1783 = vcvt.f32.s32 %v1782
    %v1784 = vcvt.f32.s32 %v1778
    %v1785 = vshll.u32 %v1784, 16
    %v1786 = vadd.s32 %v1785, %v1783
    %v1787 = vand.u32 %v1268, 65535
    %v1788 = vshra.s32 %v1268, 16
    %v1789 = vcvt.s32.f32 %v1787
    %v1790 = vcvt.s32.f32 %v1788
    %1791 = vmin.xlane.f32.xlu0 %v1790
    %v1792 = vpop.xlane.xlu0 %1791
    %vm1793 = vcmp.eq.f32.partialorder %v1790, %v1792
    %v1794 = vsel %vm1793, %v1789, inf
    %1795 = vmin.xlane.f32.xlu0 %v1794
    %v1796 = vpop.xlane.xlu0 %1795
    %v1797 = vcvt.f32.s32 %v1796
    %v1798 = vcvt.f32.s32 %v1792
    %v1799 = vshll.u32 %v1798, 16
    %v1800 = vadd.s32 %v1799, %v1797
    %vm1801 = vcmp.ne.s32.totalorder %v1282, %v63
    %vm1802 = vcmp.ne.s32.totalorder %v1296, %v64
    %vm1803 = vcmp.ne.s32.totalorder %v1310, %v65
    %vm1804 = vcmp.ne.s32.totalorder %v1324, %v66
    %vm1805 = vcmp.ne.s32.totalorder %v1338, %v67
    %vm1806 = vcmp.ne.s32.totalorder %v1352, %v68
    %vm1807 = vcmp.ne.s32.totalorder %v1366, %v69
    %vm1808 = vcmp.ne.s32.totalorder %v1380, %v70
    %vm1809 = vcmp.ne.s32.totalorder %v1394, %v71
    %vm1810 = vcmp.ne.s32.totalorder %v1408, %v72
    %vm1811 = vcmp.ne.s32.totalorder %v1422, %v73
    %vm1812 = vcmp.ne.s32.totalorder %v1436, %v74
    %vm1813 = vcmp.ne.s32.totalorder %v1450, %v75
    %vm1814 = vcmp.ne.s32.totalorder %v1464, %v76
    %vm1815 = vcmp.ne.s32.totalorder %v1478, %v77
    %vm1816 = vcmp.ne.s32.totalorder %v1492, %v78
    %vm1817 = vcmp.ne.s32.totalorder %v1506, %v79
    %vm1818 = vcmp.ne.s32.totalorder %v1520, %v80
    %vm1819 = vcmp.ne.s32.totalorder %v1534, %v81
    %vm1820 = vcmp.ne.s32.totalorder %v1548, %v82
    %vm1821 = vcmp.ne.s32.totalorder %v1562, %v83
    %vm1822 = vcmp.ne.s32.totalorder %v1576, %v84
    %vm1823 = vcmp.ne.s32.totalorder %v1590, %v85
    %vm1824 = vcmp.ne.s32.totalorder %v1604, %v86
    %vm1825 = vcmp.ne.s32.totalorder %v1618, %v87
    %vm1826 = vcmp.ne.s32.totalorder %v1632, %v88
    %vm1827 = vcmp.ne.s32.totalorder %v1646, %v89
    %vm1828 = vcmp.ne.s32.totalorder %v1660, %v90
    %vm1829 = vcmp.ne.s32.totalorder %v1674, %v91
    %vm1830 = vcmp.ne.s32.totalorder %v1688, %v92
    %vm1831 = vcmp.ne.s32.totalorder %v1702, %v93
    %vm1832 = vcmp.ne.s32.totalorder %v1716, %v94
    %vm1833 = vcmp.ne.s32.totalorder %v1730, %v95
    %vm1834 = vcmp.ne.s32.totalorder %v1744, %v96
    %vm1835 = vcmp.ne.s32.totalorder %v1758, %v97
    %vm1836 = vcmp.ne.s32.totalorder %v1772, %v98
    %vm1837 = vcmp.ne.s32.totalorder %v1786, %v99
    %vm1838 = vcmp.ne.s32.totalorder %v1800, %v100
    %v1839 = vsel %vm1801, 1, 0
    %v1840 = vsel %vm1802, 1, 0
    %v1841 = vsel %vm1803, 1, 0
    %v1842 = vsel %vm1804, 1, 0
    %v1843 = vsel %vm1805, 1, 0
    %v1844 = vsel %vm1806, 1, 0
    %v1845 = vsel %vm1807, 1, 0
    %v1846 = vsel %vm1808, 1, 0
    %v1847 = vsel %vm1809, 1, 0
    %v1848 = vsel %vm1810, 1, 0
    %v1849 = vsel %vm1811, 1, 0
    %v1850 = vsel %vm1812, 1, 0
    %v1851 = vsel %vm1813, 1, 0
    %v1852 = vsel %vm1814, 1, 0
    %v1853 = vsel %vm1815, 1, 0
    %v1854 = vsel %vm1816, 1, 0
    %v1855 = vsel %vm1817, 1, 0
    %v1856 = vsel %vm1818, 1, 0
    %v1857 = vsel %vm1819, 1, 0
    %v1858 = vsel %vm1820, 1, 0
    %v1859 = vsel %vm1821, 1, 0
    %v1860 = vsel %vm1822, 1, 0
    %v1861 = vsel %vm1823, 1, 0
    %v1862 = vsel %vm1824, 1, 0
    %v1863 = vsel %vm1825, 1, 0
    %v1864 = vsel %vm1826, 1, 0
    %v1865 = vsel %vm1827, 1, 0
    %v1866 = vsel %vm1828, 1, 0
    %v1867 = vsel %vm1829, 1, 0
    %v1868 = vsel %vm1830, 1, 0
    %v1869 = vsel %vm1831, 1, 0
    %v1870 = vsel %vm1832, 1, 0
    %v1871 = vsel %vm1833, 1, 0
    %v1872 = vsel %vm1834, 1, 0
    %v1873 = vsel %vm1835, 1, 0
    %v1874 = vsel %vm1836, 1, 0
    %v1875 = vsel %vm1837, 1, 0
    %v1876 = vsel %vm1838, 1, 0
    %v1877 = vcvt.s32.f32 %v1839
    %v1878 = vcvt.s32.f32 %v1840
    %v1879 = vcvt.s32.f32 %v1841
    %v1880 = vcvt.s32.f32 %v1842
    %v1881 = vcvt.s32.f32 %v1843
    %v1882 = vcvt.s32.f32 %v1844
    %v1883 = vcvt.s32.f32 %v1845
    %v1884 = vcvt.s32.f32 %v1846
    %v1885 = vcvt.s32.f32 %v1847
    %v1886 = vcvt.s32.f32 %v1848
    %v1887 = vcvt.s32.f32 %v1849
    %v1888 = vcvt.s32.f32 %v1850
    %v1889 = vcvt.s32.f32 %v1851
    %v1890 = vcvt.s32.f32 %v1852
    %v1891 = vcvt.s32.f32 %v1853
    %v1892 = vcvt.s32.f32 %v1854
    %v1893 = vcvt.s32.f32 %v1855
    %v1894 = vcvt.s32.f32 %v1856
    %v1895 = vcvt.s32.f32 %v1857
    %v1896 = vcvt.s32.f32 %v1858
    %v1897 = vcvt.s32.f32 %v1859
    %v1898 = vcvt.s32.f32 %v1860
    %v1899 = vcvt.s32.f32 %v1861
    %v1900 = vcvt.s32.f32 %v1862
    %v1901 = vcvt.s32.f32 %v1863
    %v1902 = vcvt.s32.f32 %v1864
    %v1903 = vcvt.s32.f32 %v1865
    %v1904 = vcvt.s32.f32 %v1866
    %v1905 = vcvt.s32.f32 %v1867
    %v1906 = vcvt.s32.f32 %v1868
    %v1907 = vcvt.s32.f32 %v1869
    %v1908 = vcvt.s32.f32 %v1870
    %v1909 = vcvt.s32.f32 %v1871
    %v1910 = vcvt.s32.f32 %v1872
    %v1911 = vcvt.s32.f32 %v1873
    %v1912 = vcvt.s32.f32 %v1874
    %v1913 = vcvt.s32.f32 %v1875
    %v1914 = vcvt.s32.f32 %v1876
    %v1915 = vmul.f32 %v1041, %v431
    %v1916 = vmul.f32 %v1042, %v432
    %v1917 = vmul.f32 %v1043, %v433
    %v1918 = vmul.f32 %v1044, %v434
    %v1919 = vmul.f32 %v1045, %v435
    %v1920 = vmul.f32 %v1046, %v436
    %v1921 = vmul.f32 %v1047, %v437
    %v1922 = vmul.f32 %v1048, %v438
    %v1923 = vmul.f32 %v1049, %v439
    %v1924 = vmul.f32 %v1050, %v440
    %v1925 = vmul.f32 %v1051, %v441
    %v1926 = vmul.f32 %v1052, %v442
    %v1927 = vmul.f32 %v1053, %v443
    %v1928 = vmul.f32 %v1054, %v444
    %v1929 = vmul.f32 %v1055, %v445
    %v1930 = vmul.f32 %v1056, %v446
    %v1931 = vmul.f32 %v1057, %v447
    %v1932 = vmul.f32 %v1058, %v448
    %v1933 = vmul.f32 %v1059, %v449
    %v1934 = vmul.f32 %v1060, %v450
    %v1935 = vmul.f32 %v1061, %v451
    %v1936 = vmul.f32 %v1062, %v452
    %v1937 = vmul.f32 %v1063, %v453
    %v1938 = vmul.f32 %v1064, %v454
    %v1939 = vmul.f32 %v1065, %v455
    %v1940 = vmul.f32 %v1066, %v456
    %v1941 = vmul.f32 %v1067, %v457
    %v1942 = vmul.f32 %v1068, %v458
    %v1943 = vmul.f32 %v1069, %v459
    %v1944 = vmul.f32 %v1070, %v460
    %v1945 = vmul.f32 %v1071, %v461
    %v1946 = vmul.f32 %v1072, %v462
    %v1947 = vmul.f32 %v1073, %v463
    %v1948 = vmul.f32 %v1074, %v464
    %v1949 = vmul.f32 %v1075, %v465
    %v1950 = vmul.f32 %v1076, %v466
    %v1951 = vmul.f32 %v1077, %v467
    %v1952 = vmul.f32 %v1078, %v468
    %1953 = vadd.xlane.f32.xlu0 %v1915
    %v1954 = vpop.xlane.xlu0 %1953
    %1955 = vadd.xlane.f32.xlu0 %v1916
    %v1956 = vpop.xlane.xlu0 %1955
    %1957 = vadd.xlane.f32.xlu0 %v1917
    %v1958 = vpop.xlane.xlu0 %1957
    %1959 = vadd.xlane.f32.xlu0 %v1918
    %v1960 = vpop.xlane.xlu0 %1959
    %1961 = vadd.xlane.f32.xlu0 %v1919
    %v1962 = vpop.xlane.xlu0 %1961
    %1963 = vadd.xlane.f32.xlu0 %v1920
    %v1964 = vpop.xlane.xlu0 %1963
    %1965 = vadd.xlane.f32.xlu0 %v1921
    %v1966 = vpop.xlane.xlu0 %1965
    %1967 = vadd.xlane.f32.xlu0 %v1922
    %v1968 = vpop.xlane.xlu0 %1967
    %1969 = vadd.xlane.f32.xlu0 %v1923
    %v1970 = vpop.xlane.xlu0 %1969
    %1971 = vadd.xlane.f32.xlu0 %v1924
    %v1972 = vpop.xlane.xlu0 %1971
    %1973 = vadd.xlane.f32.xlu0 %v1925
    %v1974 = vpop.xlane.xlu0 %1973
    %1975 = vadd.xlane.f32.xlu0 %v1926
    %v1976 = vpop.xlane.xlu0 %1975
    %1977 = vadd.xlane.f32.xlu0 %v1927
    %v1978 = vpop.xlane.xlu0 %1977
    %1979 = vadd.xlane.f32.xlu0 %v1928
    %v1980 = vpop.xlane.xlu0 %1979
    %1981 = vadd.xlane.f32.xlu0 %v1929
    %v1982 = vpop.xlane.xlu0 %1981
    %1983 = vadd.xlane.f32.xlu0 %v1930
    %v1984 = vpop.xlane.xlu0 %1983
    %1985 = vadd.xlane.f32.xlu0 %v1931
    %v1986 = vpop.xlane.xlu0 %1985
    %1987 = vadd.xlane.f32.xlu0 %v1932
    %v1988 = vpop.xlane.xlu0 %1987
    %1989 = vadd.xlane.f32.xlu0 %v1933
    %v1990 = vpop.xlane.xlu0 %1989
    %1991 = vadd.xlane.f32.xlu0 %v1934
    %v1992 = vpop.xlane.xlu0 %1991
    %1993 = vadd.xlane.f32.xlu0 %v1935
    %v1994 = vpop.xlane.xlu0 %1993
    %1995 = vadd.xlane.f32.xlu0 %v1936
    %v1996 = vpop.xlane.xlu0 %1995
    %1997 = vadd.xlane.f32.xlu0 %v1937
    %v1998 = vpop.xlane.xlu0 %1997
    %1999 = vadd.xlane.f32.xlu0 %v1938
    %v2000 = vpop.xlane.xlu0 %1999
    %2001 = vadd.xlane.f32.xlu0 %v1939
    %v2002 = vpop.xlane.xlu0 %2001
    %2003 = vadd.xlane.f32.xlu0 %v1940
    %v2004 = vpop.xlane.xlu0 %2003
    %2005 = vadd.xlane.f32.xlu0 %v1941
    %v2006 = vpop.xlane.xlu0 %2005
    %2007 = vadd.xlane.f32.xlu0 %v1942
    %v2008 = vpop.xlane.xlu0 %2007
    %2009 = vadd.xlane.f32.xlu0 %v1943
    %v2010 = vpop.xlane.xlu0 %2009
    %2011 = vadd.xlane.f32.xlu0 %v1944
    %v2012 = vpop.xlane.xlu0 %2011
    %2013 = vadd.xlane.f32.xlu0 %v1945
    %v2014 = vpop.xlane.xlu0 %2013
    %2015 = vadd.xlane.f32.xlu0 %v1946
    %v2016 = vpop.xlane.xlu0 %2015
    %2017 = vadd.xlane.f32.xlu0 %v1947
    %v2018 = vpop.xlane.xlu0 %2017
    %2019 = vadd.xlane.f32.xlu0 %v1948
    %v2020 = vpop.xlane.xlu0 %2019
    %2021 = vadd.xlane.f32.xlu0 %v1949
    %v2022 = vpop.xlane.xlu0 %2021
    %2023 = vadd.xlane.f32.xlu0 %v1950
    %v2024 = vpop.xlane.xlu0 %2023
    %2025 = vadd.xlane.f32.xlu0 %v1951
    %v2026 = vpop.xlane.xlu0 %2025
    %2027 = vadd.xlane.f32.xlu0 %v1952
    %v2028 = vpop.xlane.xlu0 %2027
    %v2029 = vlog2.pop %v546
    %v2030 = vmul.f32 %v2029, 0.6931472
    %v2031 = vlog2.pop %v548
    %v2032 = vmul.f32 %v2031, 0.6931472
    %v2033 = vlog2.pop %v550
    %v2034 = vmul.f32 %v2033, 0.6931472
    %v2035 = vlog2.pop %v552
    %v2036 = vmul.f32 %v2035, 0.6931472
    %v2037 = vlog2.pop %v554
    %v2038 = vmul.f32 %v2037, 0.6931472
    %v2039 = vlog2.pop %v556
    %v2040 = vmul.f32 %v2039, 0.6931472
    %v2041 = vlog2.pop %v558
    %v2042 = vmul.f32 %v2041, 0.6931472
    %v2043 = vlog2.pop %v560
    %v2044 = vmul.f32 %v2043, 0.6931472
    %v2045 = vlog2.pop %v562
    %v2046 = vmul.f32 %v2045, 0.6931472
    %v2047 = vlog2.pop %v564
    %v2048 = vmul.f32 %v2047, 0.6931472
    %v2049 = vlog2.pop %v566
    %v2050 = vmul.f32 %v2049, 0.6931472
    %v2051 = vlog2.pop %v568
    %v2052 = vmul.f32 %v2051, 0.6931472
    %v2053 = vlog2.pop %v570
    %v2054 = vmul.f32 %v2053, 0.6931472
    %v2055 = vlog2.pop %v572
    %v2056 = vmul.f32 %v2055, 0.6931472
    %v2057 = vlog2.pop %v574
    %v2058 = vmul.f32 %v2057, 0.6931472
    %v2059 = vlog2.pop %v576
    %v2060 = vmul.f32 %v2059, 0.6931472
    %v2061 = vlog2.pop %v578
    %v2062 = vmul.f32 %v2061, 0.6931472
    %v2063 = vlog2.pop %v580
    %v2064 = vmul.f32 %v2063, 0.6931472
    %v2065 = vlog2.pop %v582
    %v2066 = vmul.f32 %v2065, 0.6931472
    %v2067 = vlog2.pop %v584
    %v2068 = vmul.f32 %v2067, 0.6931472
    %v2069 = vlog2.pop %v586
    %v2070 = vmul.f32 %v2069, 0.6931472
    %v2071 = vlog2.pop %v588
    %v2072 = vmul.f32 %v2071, 0.6931472
    %v2073 = vlog2.pop %v590
    %v2074 = vmul.f32 %v2073, 0.6931472
    %v2075 = vlog2.pop %v592
    %v2076 = vmul.f32 %v2075, 0.6931472
    %v2077 = vlog2.pop %v594
    %v2078 = vmul.f32 %v2077, 0.6931472
    %v2079 = vlog2.pop %v596
    %v2080 = vmul.f32 %v2079, 0.6931472
    %v2081 = vlog2.pop %v598
    %v2082 = vmul.f32 %v2081, 0.6931472
    %v2083 = vlog2.pop %v600
    %v2084 = vmul.f32 %v2083, 0.6931472
    %v2085 = vlog2.pop %v602
    %v2086 = vmul.f32 %v2085, 0.6931472
    %v2087 = vlog2.pop %v604
    %v2088 = vmul.f32 %v2087, 0.6931472
    %v2089 = vlog2.pop %v606
    %v2090 = vmul.f32 %v2089, 0.6931472
    %v2091 = vlog2.pop %v608
    %v2092 = vmul.f32 %v2091, 0.6931472
    %v2093 = vlog2.pop %v610
    %v2094 = vmul.f32 %v2093, 0.6931472
    %v2095 = vlog2.pop %v612
    %v2096 = vmul.f32 %v2095, 0.6931472
    %v2097 = vlog2.pop %v614
    %v2098 = vmul.f32 %v2097, 0.6931472
    %v2099 = vlog2.pop %v616
    %v2100 = vmul.f32 %v2099, 0.6931472
    %v2101 = vlog2.pop %v618
    %v2102 = vmul.f32 %v2101, 0.6931472
    %v2103 = vlog2.pop %v620
    %v2104 = vmul.f32 %v2103, 0.6931472
    %v2105 = vmul.f32 %v1155, %v2030
    %v2106 = vmul.f32 %v1156, %v2032
    %v2107 = vmul.f32 %v1157, %v2034
    %v2108 = vmul.f32 %v1158, %v2036
    %v2109 = vmul.f32 %v1159, %v2038
    %v2110 = vmul.f32 %v1160, %v2040
    %v2111 = vmul.f32 %v1161, %v2042
    %v2112 = vmul.f32 %v1162, %v2044
    %v2113 = vmul.f32 %v1163, %v2046
    %v2114 = vmul.f32 %v1164, %v2048
    %v2115 = vmul.f32 %v1165, %v2050
    %v2116 = vmul.f32 %v1166, %v2052
    %v2117 = vmul.f32 %v1167, %v2054
    %v2118 = vmul.f32 %v1168, %v2056
    %v2119 = vmul.f32 %v1169, %v2058
    %v2120 = vmul.f32 %v1170, %v2060
    %v2121 = vmul.f32 %v1171, %v2062
    %v2122 = vmul.f32 %v1172, %v2064
    %v2123 = vmul.f32 %v1173, %v2066
    %v2124 = vmul.f32 %v1174, %v2068
    %v2125 = vmul.f32 %v1175, %v2070
    %v2126 = vmul.f32 %v1176, %v2072
    %v2127 = vmul.f32 %v1177, %v2074
    %v2128 = vmul.f32 %v1178, %v2076
    %v2129 = vmul.f32 %v1179, %v2078
    %v2130 = vmul.f32 %v1180, %v2080
    %v2131 = vmul.f32 %v1181, %v2082
    %v2132 = vmul.f32 %v1182, %v2084
    %v2133 = vmul.f32 %v1183, %v2086
    %v2134 = vmul.f32 %v1184, %v2088
    %v2135 = vmul.f32 %v1185, %v2090
    %v2136 = vmul.f32 %v1186, %v2092
    %v2137 = vmul.f32 %v1187, %v2094
    %v2138 = vmul.f32 %v1188, %v2096
    %v2139 = vmul.f32 %v1189, %v2098
    %v2140 = vmul.f32 %v1190, %v2100
    %v2141 = vmul.f32 %v1191, %v2102
    %v2142 = vmul.f32 %v1192, %v2104
    %v2143 = vsub.f32 %v2105, %v1954
    %v2144 = vsub.f32 %v2106, %v1956
    %v2145 = vsub.f32 %v2107, %v1958
    %v2146 = vsub.f32 %v2108, %v1960
    %v2147 = vsub.f32 %v2109, %v1962
    %v2148 = vsub.f32 %v2110, %v1964
    %v2149 = vsub.f32 %v2111, %v1966
    %v2150 = vsub.f32 %v2112, %v1968
    %v2151 = vsub.f32 %v2113, %v1970
    %v2152 = vsub.f32 %v2114, %v1972
    %v2153 = vsub.f32 %v2115, %v1974
    %v2154 = vsub.f32 %v2116, %v1976
    %v2155 = vsub.f32 %v2117, %v1978
    %v2156 = vsub.f32 %v2118, %v1980
    %v2157 = vsub.f32 %v2119, %v1982
    %v2158 = vsub.f32 %v2120, %v1984
    %v2159 = vsub.f32 %v2121, %v1986
    %v2160 = vsub.f32 %v2122, %v1988
    %v2161 = vsub.f32 %v2123, %v1990
    %v2162 = vsub.f32 %v2124, %v1992
    %v2163 = vsub.f32 %v2125, %v1994
    %v2164 = vsub.f32 %v2126, %v1996
    %v2165 = vsub.f32 %v2127, %v1998
    %v2166 = vsub.f32 %v2128, %v2000
    %v2167 = vsub.f32 %v2129, %v2002
    %v2168 = vsub.f32 %v2130, %v2004
    %v2169 = vsub.f32 %v2131, %v2006
    %v2170 = vsub.f32 %v2132, %v2008
    %v2171 = vsub.f32 %v2133, %v2010
    %v2172 = vsub.f32 %v2134, %v2012
    %v2173 = vsub.f32 %v2135, %v2014
    %v2174 = vsub.f32 %v2136, %v2016
    %v2175 = vsub.f32 %v2137, %v2018
    %v2176 = vsub.f32 %v2138, %v2020
    %v2177 = vsub.f32 %v2139, %v2022
    %v2178 = vsub.f32 %v2140, %v2024
    %v2179 = vsub.f32 %v2141, %v2026
    %v2180 = vsub.f32 %v2142, %v2028
    %v2181 = vadd.f32 %v1041, %v1042
    %v2182 = vadd.f32 %v2181, %v1043
    %v2183 = vadd.f32 %v2182, %v1044
    %v2184 = vadd.f32 %v2183, %v1045
    %v2185 = vadd.f32 %v2184, %v1046
    %v2186 = vadd.f32 %v2185, %v1047
    %v2187 = vadd.f32 %v2186, %v1048
    %v2188 = vadd.f32 %v2187, %v1049
    %v2189 = vadd.f32 %v2188, %v1050
    %v2190 = vadd.f32 %v2189, %v1051
    %v2191 = vadd.f32 %v2190, %v1052
    %v2192 = vadd.f32 %v2191, %v1053
    %v2193 = vadd.f32 %v2192, %v1054
    %v2194 = vadd.f32 %v2193, %v1055
    %v2195 = vadd.f32 %v2194, %v1056
    %v2196 = vadd.f32 %v2195, %v1057
    %v2197 = vadd.f32 %v2196, %v1058
    %v2198 = vadd.f32 %v2197, %v1059
    %v2199 = vadd.f32 %v2198, %v1060
    %v2200 = vadd.f32 %v2199, %v1061
    %v2201 = vadd.f32 %v2200, %v1062
    %v2202 = vadd.f32 %v2201, %v1063
    %v2203 = vadd.f32 %v2202, %v1064
    %v2204 = vadd.f32 %v2203, %v1065
    %v2205 = vadd.f32 %v2204, %v1066
    %v2206 = vadd.f32 %v2205, %v1067
    %v2207 = vadd.f32 %v2206, %v1068
    %v2208 = vadd.f32 %v2207, %v1069
    %v2209 = vadd.f32 %v2208, %v1070
    %v2210 = vadd.f32 %v2209, %v1071
    %v2211 = vadd.f32 %v2210, %v1072
    %v2212 = vadd.f32 %v2211, %v1073
    %v2213 = vadd.f32 %v2212, %v1074
    %v2214 = vadd.f32 %v2213, %v1075
    %v2215 = vadd.f32 %v2214, %v1076
    %v2216 = vadd.f32 %v2215, %v1077
    %v2217 = vadd.f32 %v2216, %v1078
    %v2218 = vrot.slane %v2217, 4
    %v2219 = vadd.f32 %v2217, %v2218
    %v2220 = vrot.slane %v2219, 2
    %v2221 = vadd.f32 %v2219, %v2220
    %v2222 = vrot.slane %v2221, 1
    %v2223 = vadd.f32 %v2221, %v2222
    %2225 = vset.pattern.permute.xlu0 0
    %2226 = vperm.xlu0 %2225, %v1877
    %v2227 = vpop.permute.xlu0 %2226
    %2230 = vset.pattern.permute.xlu0 0
    %2231 = vperm.xlu0 %2230, %v1878
    %v2232 = vpop.permute.xlu0 %2231
    %2235 = vset.pattern.permute.xlu0 0
    %2236 = vperm.xlu0 %2235, %v1879
    %v2237 = vpop.permute.xlu0 %2236
    %2240 = vset.pattern.permute.xlu0 0
    %2241 = vperm.xlu0 %2240, %v1880
    %v2242 = vpop.permute.xlu0 %2241
    %2245 = vset.pattern.permute.xlu0 0
    %2246 = vperm.xlu0 %2245, %v1881
    %v2247 = vpop.permute.xlu0 %2246
    %2250 = vset.pattern.permute.xlu0 0
    %2251 = vperm.xlu0 %2250, %v1882
    %v2252 = vpop.permute.xlu0 %2251
    %2255 = vset.pattern.permute.xlu0 0
    %2256 = vperm.xlu0 %2255, %v1883
    %v2257 = vpop.permute.xlu0 %2256
    %2260 = vset.pattern.permute.xlu0 0
    %2261 = vperm.xlu0 %2260, %v1884
    %v2262 = vpop.permute.xlu0 %2261
    %2265 = vset.pattern.permute.xlu0 0
    %2266 = vperm.xlu0 %2265, %v1885
    %v2267 = vpop.permute.xlu0 %2266
    %2270 = vset.pattern.permute.xlu0 0
    %2271 = vperm.xlu0 %2270, %v1886
    %v2272 = vpop.permute.xlu0 %2271
    %2275 = vset.pattern.permute.xlu0 0
    %2276 = vperm.xlu0 %2275, %v1887
    %v2277 = vpop.permute.xlu0 %2276
    %2280 = vset.pattern.permute.xlu0 0
    %2281 = vperm.xlu0 %2280, %v1888
    %v2282 = vpop.permute.xlu0 %2281
    %2285 = vset.pattern.permute.xlu0 0
    %2286 = vperm.xlu0 %2285, %v1889
    %v2287 = vpop.permute.xlu0 %2286
    %2290 = vset.pattern.permute.xlu0 0
    %2291 = vperm.xlu0 %2290, %v1890
    %v2292 = vpop.permute.xlu0 %2291
    %2295 = vset.pattern.permute.xlu0 0
    %2296 = vperm.xlu0 %2295, %v1891
    %v2297 = vpop.permute.xlu0 %2296
    %2300 = vset.pattern.permute.xlu0 0
    %2301 = vperm.xlu0 %2300, %v1892
    %v2302 = vpop.permute.xlu0 %2301
    %2305 = vset.pattern.permute.xlu0 0
    %2306 = vperm.xlu0 %2305, %v1893
    %v2307 = vpop.permute.xlu0 %2306
    %2310 = vset.pattern.permute.xlu0 0
    %2311 = vperm.xlu0 %2310, %v1894
    %v2312 = vpop.permute.xlu0 %2311
    %2315 = vset.pattern.permute.xlu0 0
    %2316 = vperm.xlu0 %2315, %v1895
    %v2317 = vpop.permute.xlu0 %2316
    %2320 = vset.pattern.permute.xlu0 0
    %2321 = vperm.xlu0 %2320, %v1896
    %v2322 = vpop.permute.xlu0 %2321
    %2325 = vset.pattern.permute.xlu0 0
    %2326 = vperm.xlu0 %2325, %v1897
    %v2327 = vpop.permute.xlu0 %2326
    %2330 = vset.pattern.permute.xlu0 0
    %2331 = vperm.xlu0 %2330, %v1898
    %v2332 = vpop.permute.xlu0 %2331
    %2335 = vset.pattern.permute.xlu0 0
    %2336 = vperm.xlu0 %2335, %v1899
    %v2337 = vpop.permute.xlu0 %2336
    %2340 = vset.pattern.permute.xlu0 0
    %2341 = vperm.xlu0 %2340, %v1900
    %v2342 = vpop.permute.xlu0 %2341
    %2345 = vset.pattern.permute.xlu0 0
    %2346 = vperm.xlu0 %2345, %v1901
    %v2347 = vpop.permute.xlu0 %2346
    %2350 = vset.pattern.permute.xlu0 0
    %2351 = vperm.xlu0 %2350, %v1902
    %v2352 = vpop.permute.xlu0 %2351
    %2355 = vset.pattern.permute.xlu0 0
    %2356 = vperm.xlu0 %2355, %v1903
    %v2357 = vpop.permute.xlu0 %2356
    %2360 = vset.pattern.permute.xlu0 0
    %2361 = vperm.xlu0 %2360, %v1904
    %v2362 = vpop.permute.xlu0 %2361
    %2365 = vset.pattern.permute.xlu0 0
    %2366 = vperm.xlu0 %2365, %v1905
    %v2367 = vpop.permute.xlu0 %2366
    %2370 = vset.pattern.permute.xlu0 0
    %2371 = vperm.xlu0 %2370, %v1906
    %v2372 = vpop.permute.xlu0 %2371
    %2375 = vset.pattern.permute.xlu0 0
    %2376 = vperm.xlu0 %2375, %v1907
    %v2377 = vpop.permute.xlu0 %2376
    %2380 = vset.pattern.permute.xlu0 0
    %2381 = vperm.xlu0 %2380, %v1908
    %v2382 = vpop.permute.xlu0 %2381
    %2385 = vset.pattern.permute.xlu0 0
    %2386 = vperm.xlu0 %2385, %v1909
    %v2387 = vpop.permute.xlu0 %2386
    %2390 = vset.pattern.permute.xlu0 0
    %2391 = vperm.xlu0 %2390, %v1910
    %v2392 = vpop.permute.xlu0 %2391
    %2395 = vset.pattern.permute.xlu0 0
    %2396 = vperm.xlu0 %2395, %v1911
    %v2397 = vpop.permute.xlu0 %2396
    %2400 = vset.pattern.permute.xlu0 0
    %2401 = vperm.xlu0 %2400, %v1912
    %v2402 = vpop.permute.xlu0 %2401
    %2405 = vset.pattern.permute.xlu0 0
    %2406 = vperm.xlu0 %2405, %v1913
    %v2407 = vpop.permute.xlu0 %2406
    %2410 = vset.pattern.permute.xlu0 0
    %2411 = vperm.xlu0 %2410, %v1914
    %v2412 = vpop.permute.xlu0 %2411
    %v2414 = vmul.f32 %v1041, %v2227
    %v2415 = vmul.f32 %v1042, %v2232
    %v2416 = vmul.f32 %v1043, %v2237
    %v2417 = vmul.f32 %v1044, %v2242
    %v2418 = vmul.f32 %v1045, %v2247
    %v2419 = vmul.f32 %v1046, %v2252
    %v2420 = vmul.f32 %v1047, %v2257
    %v2421 = vmul.f32 %v1048, %v2262
    %v2422 = vmul.f32 %v1049, %v2267
    %v2423 = vmul.f32 %v1050, %v2272
    %v2424 = vmul.f32 %v1051, %v2277
    %v2425 = vmul.f32 %v1052, %v2282
    %v2426 = vmul.f32 %v1053, %v2287
    %v2427 = vmul.f32 %v1054, %v2292
    %v2428 = vmul.f32 %v1055, %v2297
    %v2429 = vmul.f32 %v1056, %v2302
    %v2430 = vmul.f32 %v1057, %v2307
    %v2431 = vmul.f32 %v1058, %v2312
    %v2432 = vmul.f32 %v1059, %v2317
    %v2433 = vmul.f32 %v1060, %v2322
    %v2434 = vmul.f32 %v1061, %v2327
    %v2435 = vmul.f32 %v1062, %v2332
    %v2436 = vmul.f32 %v1063, %v2337
    %v2437 = vmul.f32 %v1064, %v2342
    %v2438 = vmul.f32 %v1065, %v2347
    %v2439 = vmul.f32 %v1066, %v2352
    %v2440 = vmul.f32 %v1067, %v2357
    %v2441 = vmul.f32 %v1068, %v2362
    %v2442 = vmul.f32 %v1069, %v2367
    %v2443 = vmul.f32 %v1070, %v2372
    %v2444 = vmul.f32 %v1071, %v2377
    %v2445 = vmul.f32 %v1072, %v2382
    %v2446 = vmul.f32 %v1073, %v2387
    %v2447 = vmul.f32 %v1074, %v2392
    %v2448 = vmul.f32 %v1075, %v2397
    %v2449 = vmul.f32 %v1076, %v2402
    %v2450 = vmul.f32 %v1077, %v2407
    %v2451 = vmul.f32 %v1078, %v2412
    %v2452 = vadd.f32 %v2414, %v2415
    %v2453 = vadd.f32 %v2452, %v2416
    %v2454 = vadd.f32 %v2453, %v2417
    %v2455 = vadd.f32 %v2454, %v2418
    %v2456 = vadd.f32 %v2455, %v2419
    %v2457 = vadd.f32 %v2456, %v2420
    %v2458 = vadd.f32 %v2457, %v2421
    %v2459 = vadd.f32 %v2458, %v2422
    %v2460 = vadd.f32 %v2459, %v2423
    %v2461 = vadd.f32 %v2460, %v2424
    %v2462 = vadd.f32 %v2461, %v2425
    %v2463 = vadd.f32 %v2462, %v2426
    %v2464 = vadd.f32 %v2463, %v2427
    %v2465 = vadd.f32 %v2464, %v2428
    %v2466 = vadd.f32 %v2465, %v2429
    %v2467 = vadd.f32 %v2466, %v2430
    %v2468 = vadd.f32 %v2467, %v2431
    %v2469 = vadd.f32 %v2468, %v2432
    %v2470 = vadd.f32 %v2469, %v2433
    %v2471 = vadd.f32 %v2470, %v2434
    %v2472 = vadd.f32 %v2471, %v2435
    %v2473 = vadd.f32 %v2472, %v2436
    %v2474 = vadd.f32 %v2473, %v2437
    %v2475 = vadd.f32 %v2474, %v2438
    %v2476 = vadd.f32 %v2475, %v2439
    %v2477 = vadd.f32 %v2476, %v2440
    %v2478 = vadd.f32 %v2477, %v2441
    %v2479 = vadd.f32 %v2478, %v2442
    %v2480 = vadd.f32 %v2479, %v2443
    %v2481 = vadd.f32 %v2480, %v2444
    %v2482 = vadd.f32 %v2481, %v2445
    %v2483 = vadd.f32 %v2482, %v2446
    %v2484 = vadd.f32 %v2483, %v2447
    %v2485 = vadd.f32 %v2484, %v2448
    %v2486 = vadd.f32 %v2485, %v2449
    %v2487 = vadd.f32 %v2486, %v2450
    %v2488 = vadd.f32 %v2487, %v2451
    %v2489 = vrot.slane %v2488, 4
    %v2490 = vadd.f32 %v2488, %v2489
    %v2491 = vrot.slane %v2490, 2
    %v2492 = vadd.f32 %v2490, %v2491
    %v2493 = vrot.slane %v2492, 1
    %v2494 = vadd.f32 %v2492, %v2493
    %2496 = vset.pattern.permute.xlu0 0
    %2497 = vperm.xlu0 %2496, %v2143
    %v2498 = vpop.permute.xlu0 %2497
    %2501 = vset.pattern.permute.xlu0 0
    %2502 = vperm.xlu0 %2501, %v2144
    %v2503 = vpop.permute.xlu0 %2502
    %2506 = vset.pattern.permute.xlu0 0
    %2507 = vperm.xlu0 %2506, %v2145
    %v2508 = vpop.permute.xlu0 %2507
    %2511 = vset.pattern.permute.xlu0 0
    %2512 = vperm.xlu0 %2511, %v2146
    %v2513 = vpop.permute.xlu0 %2512
    %2516 = vset.pattern.permute.xlu0 0
    %2517 = vperm.xlu0 %2516, %v2147
    %v2518 = vpop.permute.xlu0 %2517
    %2521 = vset.pattern.permute.xlu0 0
    %2522 = vperm.xlu0 %2521, %v2148
    %v2523 = vpop.permute.xlu0 %2522
    %2526 = vset.pattern.permute.xlu0 0
    %2527 = vperm.xlu0 %2526, %v2149
    %v2528 = vpop.permute.xlu0 %2527
    %2531 = vset.pattern.permute.xlu0 0
    %2532 = vperm.xlu0 %2531, %v2150
    %v2533 = vpop.permute.xlu0 %2532
    %2536 = vset.pattern.permute.xlu0 0
    %2537 = vperm.xlu0 %2536, %v2151
    %v2538 = vpop.permute.xlu0 %2537
    %2541 = vset.pattern.permute.xlu0 0
    %2542 = vperm.xlu0 %2541, %v2152
    %v2543 = vpop.permute.xlu0 %2542
    %2546 = vset.pattern.permute.xlu0 0
    %2547 = vperm.xlu0 %2546, %v2153
    %v2548 = vpop.permute.xlu0 %2547
    %2551 = vset.pattern.permute.xlu0 0
    %2552 = vperm.xlu0 %2551, %v2154
    %v2553 = vpop.permute.xlu0 %2552
    %2556 = vset.pattern.permute.xlu0 0
    %2557 = vperm.xlu0 %2556, %v2155
    %v2558 = vpop.permute.xlu0 %2557
    %2561 = vset.pattern.permute.xlu0 0
    %2562 = vperm.xlu0 %2561, %v2156
    %v2563 = vpop.permute.xlu0 %2562
    %2566 = vset.pattern.permute.xlu0 0
    %2567 = vperm.xlu0 %2566, %v2157
    %v2568 = vpop.permute.xlu0 %2567
    %2571 = vset.pattern.permute.xlu0 0
    %2572 = vperm.xlu0 %2571, %v2158
    %v2573 = vpop.permute.xlu0 %2572
    %2576 = vset.pattern.permute.xlu0 0
    %2577 = vperm.xlu0 %2576, %v2159
    %v2578 = vpop.permute.xlu0 %2577
    %2581 = vset.pattern.permute.xlu0 0
    %2582 = vperm.xlu0 %2581, %v2160
    %v2583 = vpop.permute.xlu0 %2582
    %2586 = vset.pattern.permute.xlu0 0
    %2587 = vperm.xlu0 %2586, %v2161
    %v2588 = vpop.permute.xlu0 %2587
    %2591 = vset.pattern.permute.xlu0 0
    %2592 = vperm.xlu0 %2591, %v2162
    %v2593 = vpop.permute.xlu0 %2592
    %2596 = vset.pattern.permute.xlu0 0
    %2597 = vperm.xlu0 %2596, %v2163
    %v2598 = vpop.permute.xlu0 %2597
    %2601 = vset.pattern.permute.xlu0 0
    %2602 = vperm.xlu0 %2601, %v2164
    %v2603 = vpop.permute.xlu0 %2602
    %2606 = vset.pattern.permute.xlu0 0
    %2607 = vperm.xlu0 %2606, %v2165
    %v2608 = vpop.permute.xlu0 %2607
    %2611 = vset.pattern.permute.xlu0 0
    %2612 = vperm.xlu0 %2611, %v2166
    %v2613 = vpop.permute.xlu0 %2612
    %2616 = vset.pattern.permute.xlu0 0
    %2617 = vperm.xlu0 %2616, %v2167
    %v2618 = vpop.permute.xlu0 %2617
    %2621 = vset.pattern.permute.xlu0 0
    %2622 = vperm.xlu0 %2621, %v2168
    %v2623 = vpop.permute.xlu0 %2622
    %2626 = vset.pattern.permute.xlu0 0
    %2627 = vperm.xlu0 %2626, %v2169
    %v2628 = vpop.permute.xlu0 %2627
    %2631 = vset.pattern.permute.xlu0 0
    %2632 = vperm.xlu0 %2631, %v2170
    %v2633 = vpop.permute.xlu0 %2632
    %2636 = vset.pattern.permute.xlu0 0
    %2637 = vperm.xlu0 %2636, %v2171
    %v2638 = vpop.permute.xlu0 %2637
    %2641 = vset.pattern.permute.xlu0 0
    %2642 = vperm.xlu0 %2641, %v2172
    %v2643 = vpop.permute.xlu0 %2642
    %2646 = vset.pattern.permute.xlu0 0
    %2647 = vperm.xlu0 %2646, %v2173
    %v2648 = vpop.permute.xlu0 %2647
    %2651 = vset.pattern.permute.xlu0 0
    %2652 = vperm.xlu0 %2651, %v2174
    %v2653 = vpop.permute.xlu0 %2652
    %2656 = vset.pattern.permute.xlu0 0
    %2657 = vperm.xlu0 %2656, %v2175
    %v2658 = vpop.permute.xlu0 %2657
    %2661 = vset.pattern.permute.xlu0 0
    %2662 = vperm.xlu0 %2661, %v2176
    %v2663 = vpop.permute.xlu0 %2662
    %2666 = vset.pattern.permute.xlu0 0
    %2667 = vperm.xlu0 %2666, %v2177
    %v2668 = vpop.permute.xlu0 %2667
    %2671 = vset.pattern.permute.xlu0 0
    %2672 = vperm.xlu0 %2671, %v2178
    %v2673 = vpop.permute.xlu0 %2672
    %2676 = vset.pattern.permute.xlu0 0
    %2677 = vperm.xlu0 %2676, %v2179
    %v2678 = vpop.permute.xlu0 %2677
    %2681 = vset.pattern.permute.xlu0 0
    %2682 = vperm.xlu0 %2681, %v2180
    %v2683 = vpop.permute.xlu0 %2682
    %v2685 = vmul.f32 %v1041, %v2498
    %v2686 = vmul.f32 %v1042, %v2503
    %v2687 = vmul.f32 %v1043, %v2508
    %v2688 = vmul.f32 %v1044, %v2513
    %v2689 = vmul.f32 %v1045, %v2518
    %v2690 = vmul.f32 %v1046, %v2523
    %v2691 = vmul.f32 %v1047, %v2528
    %v2692 = vmul.f32 %v1048, %v2533
    %v2693 = vmul.f32 %v1049, %v2538
    %v2694 = vmul.f32 %v1050, %v2543
    %v2695 = vmul.f32 %v1051, %v2548
    %v2696 = vmul.f32 %v1052, %v2553
    %v2697 = vmul.f32 %v1053, %v2558
    %v2698 = vmul.f32 %v1054, %v2563
    %v2699 = vmul.f32 %v1055, %v2568
    %v2700 = vmul.f32 %v1056, %v2573
    %v2701 = vmul.f32 %v1057, %v2578
    %v2702 = vmul.f32 %v1058, %v2583
    %v2703 = vmul.f32 %v1059, %v2588
    %v2704 = vmul.f32 %v1060, %v2593
    %v2705 = vmul.f32 %v1061, %v2598
    %v2706 = vmul.f32 %v1062, %v2603
    %v2707 = vmul.f32 %v1063, %v2608
    %v2708 = vmul.f32 %v1064, %v2613
    %v2709 = vmul.f32 %v1065, %v2618
    %v2710 = vmul.f32 %v1066, %v2623
    %v2711 = vmul.f32 %v1067, %v2628
    %v2712 = vmul.f32 %v1068, %v2633
    %v2713 = vmul.f32 %v1069, %v2638
    %v2714 = vmul.f32 %v1070, %v2643
    %v2715 = vmul.f32 %v1071, %v2648
    %v2716 = vmul.f32 %v1072, %v2653
    %v2717 = vmul.f32 %v1073, %v2658
    %v2718 = vmul.f32 %v1074, %v2663
    %v2719 = vmul.f32 %v1075, %v2668
    %v2720 = vmul.f32 %v1076, %v2673
    %v2721 = vmul.f32 %v1077, %v2678
    %v2722 = vmul.f32 %v1078, %v2683
    %v2723 = vadd.f32 %v2685, %v2686
    %v2724 = vadd.f32 %v2723, %v2687
    %v2725 = vadd.f32 %v2724, %v2688
    %v2726 = vadd.f32 %v2725, %v2689
    %v2727 = vadd.f32 %v2726, %v2690
    %v2728 = vadd.f32 %v2727, %v2691
    %v2729 = vadd.f32 %v2728, %v2692
    %v2730 = vadd.f32 %v2729, %v2693
    %v2731 = vadd.f32 %v2730, %v2694
    %v2732 = vadd.f32 %v2731, %v2695
    %v2733 = vadd.f32 %v2732, %v2696
    %v2734 = vadd.f32 %v2733, %v2697
    %v2735 = vadd.f32 %v2734, %v2698
    %v2736 = vadd.f32 %v2735, %v2699
    %v2737 = vadd.f32 %v2736, %v2700
    %v2738 = vadd.f32 %v2737, %v2701
    %v2739 = vadd.f32 %v2738, %v2702
    %v2740 = vadd.f32 %v2739, %v2703
    %v2741 = vadd.f32 %v2740, %v2704
    %v2742 = vadd.f32 %v2741, %v2705
    %v2743 = vadd.f32 %v2742, %v2706
    %v2744 = vadd.f32 %v2743, %v2707
    %v2745 = vadd.f32 %v2744, %v2708
    %v2746 = vadd.f32 %v2745, %v2709
    %v2747 = vadd.f32 %v2746, %v2710
    %v2748 = vadd.f32 %v2747, %v2711
    %v2749 = vadd.f32 %v2748, %v2712
    %v2750 = vadd.f32 %v2749, %v2713
    %v2751 = vadd.f32 %v2750, %v2714
    %v2752 = vadd.f32 %v2751, %v2715
    %v2753 = vadd.f32 %v2752, %v2716
    %v2754 = vadd.f32 %v2753, %v2717
    %v2755 = vadd.f32 %v2754, %v2718
    %v2756 = vadd.f32 %v2755, %v2719
    %v2757 = vadd.f32 %v2756, %v2720
    %v2758 = vadd.f32 %v2757, %v2721
    %v2759 = vadd.f32 %v2758, %v2722
    %v2760 = vrot.slane %v2759, 4
    %v2761 = vadd.f32 %v2759, %v2760
    %v2762 = vrot.slane %v2761, 2
    %v2763 = vadd.f32 %v2761, %v2762
    %v2764 = vrot.slane %v2763, 1
    %v2765 = vadd.f32 %v2763, %v2764
    %vm2766 = vcmp.gt.f32.partialorder %v2494, 0.0
    %v2767 = vsel %vm2766, %v2494, 1.0
    %vm2768 = vcmp.gt.f32.partialorder %v2223, 0.0
    %v2769 = vsel %vm2768, %v2223, 1.0
    %v2770 = vrcp.pop %v2769
    %v2771 = vmul.f32 %v2769, %v2770
    %v2772 = vsub.f32 1.0, %v2771
    %v2773 = vmul.f32 %v2770, %v2772
    %v2774 = vadd.f32 %v2770, %v2773
    %vm2775 = vweird.f32 %v2769
    %vm2776 = vweird.f32 %v2770
    %vm2777 = vmor %vm2775, %vm2776
    %v2778 = vsel %vm2777, %v2770, %v2774
    %v2779 = vand.u32 2147483647, %v2769
    %vm2780 = vcmp.eq.f32.partialorder %v2779, 8.507059e+37
    %v2781 = vand.u32 %v2769, 2147483648
    %v2782 = vor.u32 1.1754944e-38, %v2781
    %v2783 = vsel %vm2780, %v2782, %v2778
    %v2784 = vmul.f32 %v2767, %v2783
    %v2785 = vmul.f32 %v2784, %v2765
    %vm2786 = vcmask 1040384
    %v2787 = vsel %vm2786, %v2785, 0.0
    %2788 = vadd.xlane.f32.xlu0 %v2787
    %v2789 = vpop.xlane.xlu0 %2788
    %v2790 = vrot.slane %v2789, 4
    %v2791 = vadd.f32 %v2789, %v2790
    %v2792 = vrot.slane %v2791, 2
    %v2793 = vadd.f32 %v2791, %v2792
    %v2794 = vrot.slane %v2793, 1
    %v2795 = vadd.f32 %v2793, %v2794
    %s2796 = vtos %v2795
    %v2797 = vmul.f32 %v2784, %v2223
    %v2798 = vsel %vm2786, %v2797, 0.0
    %2799 = vadd.xlane.f32.xlu0 %v2798
    %v2800 = vpop.xlane.xlu0 %2799
    %v2801 = vrot.slane %v2800, 4
    %v2802 = vadd.f32 %v2800, %v2801
    %v2803 = vrot.slane %v2802, 2
    %v2804 = vadd.f32 %v2802, %v2803
    %v2805 = vrot.slane %v2804, 1
    %v2806 = vadd.f32 %v2804, %v2805
    %s2807 = vtos %v2806
    %v2808 = vstv %s2807
    %v2809 = vrcp.pop %v2808
    %v2810 = vmul.f32 %v2808, %v2809
    %v2811 = vsub.f32 1.0, %v2810
    %v2812 = vmul.f32 %v2809, %v2811
    %v2813 = vadd.f32 %v2809, %v2812
    %vm2814 = vweird.f32 %v2808
    %vm2815 = vweird.f32 %v2809
    %vm2816 = vmor %vm2814, %vm2815
    %v2817 = vsel %vm2816, %v2809, %v2813
    %v2818 = vand.u32 2147483647, %v2808
    %vm2819 = vcmp.eq.f32.partialorder %v2818, 8.507059e+37
    %v2820 = vand.u32 %v2808, 2147483648
    %v2821 = vor.u32 1.1754944e-38, %v2820
    %v2822 = vsel %vm2819, %v2821, %v2817
    %s2823 = vtos %v2822
    %s2824 = smul.f32 %s2796, %s2823
    %s2825 = sld [smem:[#allocation2]]
    %s2826 = ssub.f32 0.0, %s2825
    %v2827 = vstv %s2826
    %v2828 = vmul.f32 %v2827, 1.442695
    %v2829 = vpow.pop %v2828
    %s2830 = vtos %v2829
    %s2831 = smul.f32 %s2830, 2.0
    %s2832 = smul.f32 %s2831, %s2824
    %s2833 = sadd.f32 %s2832, %s2825
    %s2834 = scalar_lea.smem [#allocation6], 0
    %2835 = sst [smem:[%s2834]] %s2833
    // Predicated region
    $region22: #{tpu_custom_call.1} parent=1 // pred_check
      _
    $region23: #{tpu_custom_call.1} parent=1 // pred_check_branch
      %2837 = sbr.rel (0) target = $region25
    $region24: #{tpu_custom_call.1} parent=1 // pred_region
      %2839 = vsyncadd [#allocation4], 0
      %s2840 = sshll.u32 [#allocation3], 4
      %s2841 = int_to_ptr.vmem [resolvable:$true] %s2840
      %s2842 = sshll.u32 %s5, 4
      %s2843 = int_to_ptr.hbm [resolvable:$true] %s2842
      %2848 = dma.vmem_to_hbm [thread:$0]  %s2841, 4864, %s2843, [#allocation4], 128, 128, 8
    $region25: #{tpu_custom_call.1} parent=1 // pred_fallthru
      _
    // Predicated region
    $region26: #{tpu_custom_call.1} parent=1 // pred_check
      _
    $region27: #{tpu_custom_call.1} parent=1 // pred_check_branch
      %2850 = sbr.rel (0) target = $region29
    $region28: #{tpu_custom_call.1} parent=1 // pred_region
      %2852 = vsyncadd [#allocation5], 0
      %s2854 = sshll.u32 %s6, 4
      %s2855 = int_to_ptr.hbm [resolvable:$true] %s2854
      %2857 = dma.smem_to_hbm [#allocation6], 16, %s2855, [#allocation5]
    $region29: #{tpu_custom_call.1} parent=1 // pred_fallthru
      _
    // Predicated region
    $region30: #{tpu_custom_call.1} parent=1 // pred_check
      _
    $region31: #{tpu_custom_call.1} parent=1 // pred_check_branch
      %2859 = sbr.rel (0) target = $region33
    $region32: #{tpu_custom_call.1} parent=1 // pred_region
      %2861 = dma.done [#allocation4], 4864
    $region33: #{tpu_custom_call.1} parent=1 // pred_fallthru
      _
    // Predicated region
    $region34: #{tpu_custom_call.1} parent=1 // pred_check
      _
    $region35: #{tpu_custom_call.1} parent=1 // pred_check_branch
      %2863 = sbr.rel (0) target = $region37
    $region36: #{tpu_custom_call.1} parent=1 // pred_region
      %2865 = dma.done [#allocation5], 16
    $region37: #{tpu_custom_call.1} parent=1 // pred_fallthru
      _
    %2866 = sfence
    %2867 = vsyncpa [#allocation4], 1
    %2868 = vsyncpa [#allocation5], 1

</llo_original>
